<compile_context>
chip_gen: v6e
topology: v6e:2x2x1
jax: 0.10.0
libtpu: 0.0.40
codegen_flags: <defaults>
</compile_context>

<pallas_src>
import jax
import jax.numpy as jnp
import numpy as np
from jax.experimental import pallas as pl
from jax.experimental.pallas import tpu as pltpu

C_IN, C_OUT, K, PAD = 3, 16, 5, 2
H = W = 32
HP = WP = H + 2 * PAD                  # 36 padded spatial size
H_OUT = W_OUT = 16                     # spatial size after 2x2 maxpool
LANES_IN_RAW = WP * C_IN               # 108 (lane = w_pad*3 + cin)
LANES_IN = 128                         # padded to a full lane tile
LANES_CONV = W * C_OUT                 # 512 (lane = wblk*16 + cout; even-w blocks then odd-w)
LANES_POOL = W_OUT * C_OUT             # 256 (lane = w'*16 + cout)
FC_IN = C_OUT * H_OUT * W_OUT          # 4096
FC_OUT = 10
FC_OUT_PAD = 16                        # scores padded to 16 lanes inside the kernel
FC_COLS = H_OUT * FC_OUT_PAD           # 256 (col = h'*16 + out)
ROWS_CONV = 2 * H_OUT                  # 32 conv output rows per image


# ---------------- fused Pallas kernel (one image per grid step) ----------------

def _convnet2_fused_kernel(x_ref, bw_ref, cb_ref, fcw_ref, fcb_ref, o_ref):
    # x_ref  : (1, 5, 32, 128) per-kh conv LHS slabs (16 even conv rows | 16 odd rows)
    # bw_ref : (5, 128, 512)   banded conv weights (cols: even-w blocks | odd-w blocks)
    # cb_ref : (1, 256)        conv bias tiled per pooled (w', cout) lane
    # fcw_ref: (256, 256)      FC weights, row = w'*16 + c, col = h'*16 + out (padded)
    # fcb_ref: (1, 16)         FC bias (padded to 16 lanes)
    # o_ref  : (1, 1, 10)
    f32 = jnp.float32

    # Conv: 5 MXU dots (contraction over kw,cin is folded into the banded weights;
    # contraction over kh is this unrolled accumulate).
    y = jnp.dot(x_ref[0, 0], bw_ref[0], preferred_element_type=f32)          # (32, 512)
    for kh in range(1, K):
        y = y + jnp.dot(x_ref[0, kh], bw_ref[kh], preferred_element_type=f32)

    # 2x2 max pool, then bias + ReLU once on the pooled tile (max/bias/ReLU commute).
    hw = jnp.maximum(y[:, :LANES_POOL], y[:, LANES_POOL:])                   # W-pool (32, 256)
    pooled = jnp.maximum(hw[:H_OUT, :], hw[H_OUT:, :])                       # H-pool (16, 256)
    act = jnp.maximum(pooled + cb_ref[...], 0.0)                             # (16, 256)

    # FC: one (16,256)@(256,256) MXU matmul; the scores live on the block diagonal
    # p[h, 16h:16h+16].  Sum the 16 static (1,16) slices with a pairwise tree (VPU only).
    p = jnp.dot(act, fcw_ref[...], preferred_element_type=f32)               # (16, 256)
    parts = [p[h:h + 1, FC_OUT_PAD * h:FC_OUT_PAD * (h + 1)] for h in range(H_OUT)]
    while len(parts) > 1:
        parts = [parts[i] + parts[i + 1] for i in range(0, len(parts), 2)]
    scores = parts[0] + fcb_ref[...]                                         # (1, 16)
    o_ref[0] = scores[:, :FC_OUT]


# ---------------- per-call input prep (small XLA glue) ----------------

# Padded-image rows needed by conv-kernel-row kh, ordered
# [even conv rows 0,2,..,30 | odd conv rows 1,3,..,31]; conv row r reads padded row r+kh.
_ROW_GATHER = np.stack(
    [np.concatenate([np.arange(kh, kh + ROWS_CONV, 2),
                     np.arange(kh + 1, kh + 1 + ROWS_CONV, 2)]) for kh in range(K)]
).reshape(-1)                                                                 # (5*32,)


def _prep_inputs(x):
    """NCHW (N,3,32,32) -> per-kh lane-dense conv LHS slabs (N,5,32,128)."""
    n = x.shape[0]
    xhwc = jnp.transpose(x, (0, 2, 3, 1))                                     # (N,32,32,3)
    xpad = jnp.pad(xhwc, ((0, 0), (PAD, PAD), (PAD, PAD), (0, 0)))            # (N,36,36,3)
    ximg = xpad.reshape(n, HP, LANES_IN_RAW)                                  # (N,36,108)
    ximg = jnp.pad(ximg, ((0, 0), (0, 0), (0, LANES_IN - LANES_IN_RAW)))      # (N,36,128)
    lhs = jnp.take(ximg, jnp.asarray(_ROW_GATHER), axis=1)                    # (N,160,128)
    return lhs.reshape(n, K, ROWS_CONV, LANES_IN)


# ---------------- one-time weight repack (hoisted out of the forward) ----------------

def prepare_params(conv_w, conv_b, fc_w, fc_b):
    # Banded conv weights: column block b covers output column w_order[b]; its nonzero
    # rows are input lanes [3w, 3w+15).  Even-w blocks first, then odd-w blocks, so the
    # W-pool is a max of the two 256-lane halves.
    wk = jnp.transpose(conv_w, (2, 3, 1, 0)).reshape(K, K * C_IN, C_OUT)      # (5,15,16)
    w_order = list(range(0, W, 2)) + list(range(1, W, 2))
    cols = [jnp.pad(wk, ((0, 0), (3 * w, LANES_IN - K * C_IN - 3 * w), (0, 0)))
            for w in w_order]
    bw = jnp.concatenate(cols, axis=2)                                        # (5,128,512)
    cb = jnp.tile(conv_b, W_OUT).reshape(1, LANES_POOL)                       # (1,256)

    # FC weights: pooled act reaches the FC as [h', w'*16 + c]; PyTorch flattens NCHW as
    # c*256 + h'*16 + w'.  Fold that permutation in and pack columns as h'*16 + out
    # (out padded 10 -> 16) so both matmul operands and the output are lane-dense.
    fcw4 = jnp.transpose(fc_w.reshape(FC_OUT, C_OUT, H_OUT, W_OUT), (3, 1, 2, 0))  # (w,c,h,o)
    fcw4 = jnp.pad(fcw4, ((0, 0), (0, 0), (0, 0), (0, FC_OUT_PAD - FC_OUT)))
    fcw2 = fcw4.reshape(W_OUT * C_OUT, FC_COLS)                               # (256,256)
    fcb = jnp.pad(fc_b, (0, FC_OUT_PAD - FC_OUT)).reshape(1, FC_OUT_PAD)      # (1,16)
    return bw, cb, fcw2, fcb


# ---------------- forward pass ----------------

@jax.jit
def convnet2_forward(x, bw, cb, fcw2, fcb):
    n = x.shape[0]
    assert x.shape[1:] == (C_IN, H, W)
    lhs = _prep_inputs(x)

    out = pl.pallas_call(
        _convnet2_fused_kernel,
        out_shape=jax.ShapeDtypeStruct((n, 1, FC_OUT), jnp.float32),
        grid=(n,),
        in_specs=[
            pl.BlockSpec((1, K, ROWS_CONV, LANES_IN), lambda i: (i, 0, 0, 0)),
            # Constant-index weight blocks: fetched once, reused across grid steps.
            pl.BlockSpec((K, LANES_IN, LANES_CONV), lambda i: (0, 0, 0)),
            pl.BlockSpec((1, LANES_POOL), lambda i: (0, 0)),
            pl.BlockSpec((W_OUT * C_OUT, FC_COLS), lambda i: (0, 0)),
            pl.BlockSpec((1, FC_OUT_PAD), lambda i: (0, 0)),
        ],
        out_specs=pl.BlockSpec((1, 1, FC_OUT), lambda i: (i, 0, 0)),
        compiler_params=pltpu.CompilerParams(dimension_semantics=("parallel",)),
    )(lhs, bw, cb, fcw2, fcb)

    return out.reshape(n, FC_OUT)


# ---------------- pure-JAX reference (correctness check) ----------------

def reference_forward(x, conv_w, conv_b, fc_w, fc_b):
    y = jax.lax.conv_general_dilated(
        x, conv_w, window_strides=(1, 1), padding=((PAD, PAD), (PAD, PAD)),
        dimension_numbers=("NCHW", "OIHW", "NCHW"),
        precision=jax.lax.Precision.HIGHEST)
    y = jnp.maximum(y + conv_b[None, :, None, None], 0.0)
    y = jax.lax.reduce_window(y, -jnp.inf, jax.lax.max,
                              (1, 1, 2, 2), (1, 1, 2, 2), "VALID")
    y = y.reshape(y.shape[0], -1)
    return jnp.dot(y, fc_w.T, precision=jax.lax.Precision.HIGHEST) + fc_b


if __name__ == "__main__":
    key = jax.random.PRNGKey(0)
    kx, kw1, kb1, kw2, kb2 = jax.random.split(key, 5)

    batch = 2
    x = jax.random.normal(kx, (batch, C_IN, H, W), jnp.float32)

    # Deterministic parameter init (PyTorch-like uniform bounds, fixed seed).
    fan_conv = float(C_IN * K * K)
    conv_w = jax.random.uniform(kw1, (C_OUT, C_IN, K, K), jnp.float32, -1.0, 1.0) / jnp.sqrt(fan_conv)
    conv_b = jax.random.uniform(kb1, (C_OUT,), jnp.float32, -1.0, 1.0) / jnp.sqrt(fan_conv)
    fc_w = jax.random.uniform(kw2, (FC_OUT, FC_IN), jnp.float32, -1.0, 1.0) / jnp.sqrt(float(FC_IN))
    fc_b = jax.random.uniform(kb2, (FC_OUT,), jnp.float32, -1.0, 1.0) / jnp.sqrt(float(FC_IN))

    # One-time weight repack (hoisted out of the per-call forward).
    params = prepare_params(conv_w, conv_b, fc_w, fc_b)
    params = jax.block_until_ready(params)

    out = convnet2_forward(x, *params)
    out = jax.block_until_ready(out)

    ref = reference_forward(x, conv_w, conv_b, fc_w, fc_b)
    np.testing.assert_allclose(np.asarray(out), np.asarray(ref), rtol=2e-3, atol=2e-3)
    assert out.shape == (batch, FC_OUT) and out.dtype == jnp.float32

    print("KERNEL_OK")
</pallas_src>

<mosaic_0001>
module attributes {stable_mosaic.version = 11 : i64} {
  func.func @_convnet2_fused_kernel(%arg0: i32, %arg1: memref<1x5x32x128xf32, #tpu.memory_space<vmem>>, %arg2: memref<5x128x512xf32, #tpu.memory_space<vmem>>, %arg3: memref<1x256xf32, #tpu.memory_space<vmem>>, %arg4: memref<256x256xf32, #tpu.memory_space<vmem>>, %arg5: memref<1x16xf32, #tpu.memory_space<vmem>>, %arg6: memref<1x1x10xf32, #tpu.memory_space<vmem>>) attributes {dimension_semantics = [#tpu.dimension_semantics<parallel>], iteration_bounds = array<i64: 2>, scalar_prefetch = 0 : i64, scratch_operands = 0 : i64, tpu.core_type = #tpu.core_type<tc>, window_params = [{transform_indices = @transform_0, window_bounds = array<i64: 1, 5, 32, 128>}, {pipeline_mode = #tpu.pipeline_mode<synchronous>, transform_indices = @transform_1, window_bounds = array<i64: 5, 128, 512>}, {pipeline_mode = #tpu.pipeline_mode<synchronous>, transform_indices = @transform_2, window_bounds = array<i64: 1, 256>}, {pipeline_mode = #tpu.pipeline_mode<synchronous>, transform_indices = @transform_3, window_bounds = array<i64: 256, 256>}, {pipeline_mode = #tpu.pipeline_mode<synchronous>, transform_indices = @transform_4, window_bounds = array<i64: 1, 16>}, {transform_indices = @transform_5, window_bounds = array<i64: 1, 1, 10>}]} {
    %c0 = arith.constant 0 : index
    %c0_0 = arith.constant 0 : index
    %c0_1 = arith.constant 0 : index
    %c0_2 = arith.constant 0 : index
    %0 = vector.load %arg1[%c0, %c0_0, %c0_1, %c0_2] : memref<1x5x32x128xf32, #tpu.memory_space<vmem>>, vector<1x1x32x128xf32>
    %1 = vector.shape_cast %0 : vector<1x1x32x128xf32> to vector<32x128xf32>
    %c0_3 = arith.constant 0 : index
    %c0_4 = arith.constant 0 : index
    %c0_5 = arith.constant 0 : index
    %2 = vector.load %arg2[%c0_3, %c0_4, %c0_5] : memref<5x128x512xf32, #tpu.memory_space<vmem>>, vector<1x128x512xf32>
    %3 = vector.shape_cast %2 : vector<1x128x512xf32> to vector<128x512xf32>
    %cst = arith.constant dense<0.000000e+00> : vector<32x512xf32>
    %4 = tpu.matmul %1, %3, %cst {dimension_numbers = #tpu.dot_dimension_numbers<[1], [0], [0], [1], [0, 0, 1, 1], [], []>} : vector<32x128xf32>, vector<128x512xf32>, vector<32x512xf32> -> vector<32x512xf32>
    %c0_6 = arith.constant 0 : index
    %c1 = arith.constant 1 : index
    %c0_7 = arith.constant 0 : index
    %c0_8 = arith.constant 0 : index
    %5 = vector.load %arg1[%c0_6, %c1, %c0_7, %c0_8] : memref<1x5x32x128xf32, #tpu.memory_space<vmem>>, vector<1x1x32x128xf32>
    %6 = vector.shape_cast %5 : vector<1x1x32x128xf32> to vector<32x128xf32>
    %c1_9 = arith.constant 1 : index
    %c0_10 = arith.constant 0 : index
    %c0_11 = arith.constant 0 : index
    %7 = vector.load %arg2[%c1_9, %c0_10, %c0_11] : memref<5x128x512xf32, #tpu.memory_space<vmem>>, vector<1x128x512xf32>
    %8 = vector.shape_cast %7 : vector<1x128x512xf32> to vector<128x512xf32>
    %cst_12 = arith.constant dense<0.000000e+00> : vector<32x512xf32>
    %9 = tpu.matmul %6, %8, %cst_12 {dimension_numbers = #tpu.dot_dimension_numbers<[1], [0], [0], [1], [0, 0, 1, 1], [], []>} : vector<32x128xf32>, vector<128x512xf32>, vector<32x512xf32> -> vector<32x512xf32>
    %10 = arith.addf %4, %9 : vector<32x512xf32>
    %c0_13 = arith.constant 0 : index
    %c2 = arith.constant 2 : index
    %c0_14 = arith.constant 0 : index
    %c0_15 = arith.constant 0 : index
    %11 = vector.load %arg1[%c0_13, %c2, %c0_14, %c0_15] : memref<1x5x32x128xf32, #tpu.memory_space<vmem>>, vector<1x1x32x128xf32>
    %12 = vector.shape_cast %11 : vector<1x1x32x128xf32> to vector<32x128xf32>
    %c2_16 = arith.constant 2 : index
    %c0_17 = arith.constant 0 : index
    %c0_18 = arith.constant 0 : index
    %13 = vector.load %arg2[%c2_16, %c0_17, %c0_18] : memref<5x128x512xf32, #tpu.memory_space<vmem>>, vector<1x128x512xf32>
    %14 = vector.shape_cast %13 : vector<1x128x512xf32> to vector<128x512xf32>
    %cst_19 = arith.constant dense<0.000000e+00> : vector<32x512xf32>
    %15 = tpu.matmul %12, %14, %cst_19 {dimension_numbers = #tpu.dot_dimension_numbers<[1], [0], [0], [1], [0, 0, 1, 1], [], []>} : vector<32x128xf32>, vector<128x512xf32>, vector<32x512xf32> -> vector<32x512xf32>
    %16 = arith.addf %10, %15 : vector<32x512xf32>
    %c0_20 = arith.constant 0 : index
    %c3 = arith.constant 3 : index
    %c0_21 = arith.constant 0 : index
    %c0_22 = arith.constant 0 : index
    %17 = vector.load %arg1[%c0_20, %c3, %c0_21, %c0_22] : memref<1x5x32x128xf32, #tpu.memory_space<vmem>>, vector<1x1x32x128xf32>
    %18 = vector.shape_cast %17 : vector<1x1x32x128xf32> to vector<32x128xf32>
    %c3_23 = arith.constant 3 : index
    %c0_24 = arith.constant 0 : index
    %c0_25 = arith.constant 0 : index
    %19 = vector.load %arg2[%c3_23, %c0_24, %c0_25] : memref<5x128x512xf32, #tpu.memory_space<vmem>>, vector<1x128x512xf32>
    %20 = vector.shape_cast %19 : vector<1x128x512xf32> to vector<128x512xf32>
    %cst_26 = arith.constant dense<0.000000e+00> : vector<32x512xf32>
    %21 = tpu.matmul %18, %20, %cst_26 {dimension_numbers = #tpu.dot_dimension_numbers<[1], [0], [0], [1], [0, 0, 1, 1], [], []>} : vector<32x128xf32>, vector<128x512xf32>, vector<32x512xf32> -> vector<32x512xf32>
    %22 = arith.addf %16, %21 : vector<32x512xf32>
    %c0_27 = arith.constant 0 : index
    %c4 = arith.constant 4 : index
    %c0_28 = arith.constant 0 : index
    %c0_29 = arith.constant 0 : index
    %23 = vector.load %arg1[%c0_27, %c4, %c0_28, %c0_29] : memref<1x5x32x128xf32, #tpu.memory_space<vmem>>, vector<1x1x32x128xf32>
    %24 = vector.shape_cast %23 : vector<1x1x32x128xf32> to vector<32x128xf32>
    %c4_30 = arith.constant 4 : index
    %c0_31 = arith.constant 0 : index
    %c0_32 = arith.constant 0 : index
    %25 = vector.load %arg2[%c4_30, %c0_31, %c0_32] : memref<5x128x512xf32, #tpu.memory_space<vmem>>, vector<1x128x512xf32>
    %26 = vector.shape_cast %25 : vector<1x128x512xf32> to vector<128x512xf32>
    %cst_33 = arith.constant dense<0.000000e+00> : vector<32x512xf32>
    %27 = tpu.matmul %24, %26, %cst_33 {dimension_numbers = #tpu.dot_dimension_numbers<[1], [0], [0], [1], [0, 0, 1, 1], [], []>} : vector<32x128xf32>, vector<128x512xf32>, vector<32x512xf32> -> vector<32x512xf32>
    %28 = arith.addf %22, %27 : vector<32x512xf32>
    %29 = vector.extract_strided_slice %28 {offsets = [0, 0], sizes = [32, 256], strides = [1, 1]} : vector<32x512xf32> to vector<32x256xf32>
    %30 = vector.extract_strided_slice %28 {offsets = [0, 256], sizes = [32, 256], strides = [1, 1]} : vector<32x512xf32> to vector<32x256xf32>
    %31 = arith.maximumf %29, %30 : vector<32x256xf32>
    %32 = vector.extract_strided_slice %31 {offsets = [0, 0], sizes = [16, 256], strides = [1, 1]} : vector<32x256xf32> to vector<16x256xf32>
    %33 = vector.extract_strided_slice %31 {offsets = [16, 0], sizes = [16, 256], strides = [1, 1]} : vector<32x256xf32> to vector<16x256xf32>
    %34 = arith.maximumf %32, %33 : vector<16x256xf32>
    %c0_34 = arith.constant 0 : index
    %c0_35 = arith.constant 0 : index
    %35 = vector.load %arg3[%c0_34, %c0_35] : memref<1x256xf32, #tpu.memory_space<vmem>>, vector<1x256xf32>
    %36 = vector.broadcast %35 : vector<1x256xf32> to vector<16x256xf32>
    %37 = arith.addf %34, %36 : vector<16x256xf32>
    %cst_36 = arith.constant 0.000000e+00 : f32
    %38 = vector.broadcast %cst_36 : f32 to vector<16x256xf32>
    %39 = arith.maximumf %37, %38 : vector<16x256xf32>
    %c0_37 = arith.constant 0 : index
    %c0_38 = arith.constant 0 : index
    %40 = vector.load %arg4[%c0_37, %c0_38] : memref<256x256xf32, #tpu.memory_space<vmem>>, vector<256x256xf32>
    %cst_39 = arith.constant dense<0.000000e+00> : vector<16x256xf32>
    %41 = tpu.matmul %39, %40, %cst_39 {dimension_numbers = #tpu.dot_dimension_numbers<[1], [0], [0], [1], [0, 0, 1, 1], [], []>} : vector<16x256xf32>, vector<256x256xf32>, vector<16x256xf32> -> vector<16x256xf32>
    %42 = vector.extract_strided_slice %41 {offsets = [0, 0], sizes = [1, 16], strides = [1, 1]} : vector<16x256xf32> to vector<1x16xf32>
    %43 = vector.extract_strided_slice %41 {offsets = [1, 16], sizes = [1, 16], strides = [1, 1]} : vector<16x256xf32> to vector<1x16xf32>
    %44 = vector.extract_strided_slice %41 {offsets = [2, 32], sizes = [1, 16], strides = [1, 1]} : vector<16x256xf32> to vector<1x16xf32>
    %45 = vector.extract_strided_slice %41 {offsets = [3, 48], sizes = [1, 16], strides = [1, 1]} : vector<16x256xf32> to vector<1x16xf32>
    %46 = vector.extract_strided_slice %41 {offsets = [4, 64], sizes = [1, 16], strides = [1, 1]} : vector<16x256xf32> to vector<1x16xf32>
    %47 = vector.extract_strided_slice %41 {offsets = [5, 80], sizes = [1, 16], strides = [1, 1]} : vector<16x256xf32> to vector<1x16xf32>
    %48 = vector.extract_strided_slice %41 {offsets = [6, 96], sizes = [1, 16], strides = [1, 1]} : vector<16x256xf32> to vector<1x16xf32>
    %49 = vector.extract_strided_slice %41 {offsets = [7, 112], sizes = [1, 16], strides = [1, 1]} : vector<16x256xf32> to vector<1x16xf32>
    %50 = vector.extract_strided_slice %41 {offsets = [8, 128], sizes = [1, 16], strides = [1, 1]} : vector<16x256xf32> to vector<1x16xf32>
    %51 = vector.extract_strided_slice %41 {offsets = [9, 144], sizes = [1, 16], strides = [1, 1]} : vector<16x256xf32> to vector<1x16xf32>
    %52 = vector.extract_strided_slice %41 {offsets = [10, 160], sizes = [1, 16], strides = [1, 1]} : vector<16x256xf32> to vector<1x16xf32>
    %53 = vector.extract_strided_slice %41 {offsets = [11, 176], sizes = [1, 16], strides = [1, 1]} : vector<16x256xf32> to vector<1x16xf32>
    %54 = vector.extract_strided_slice %41 {offsets = [12, 192], sizes = [1, 16], strides = [1, 1]} : vector<16x256xf32> to vector<1x16xf32>
    %55 = vector.extract_strided_slice %41 {offsets = [13, 208], sizes = [1, 16], strides = [1, 1]} : vector<16x256xf32> to vector<1x16xf32>
    %56 = vector.extract_strided_slice %41 {offsets = [14, 224], sizes = [1, 16], strides = [1, 1]} : vector<16x256xf32> to vector<1x16xf32>
    %57 = vector.extract_strided_slice %41 {offsets = [15, 240], sizes = [1, 16], strides = [1, 1]} : vector<16x256xf32> to vector<1x16xf32>
    %58 = arith.addf %42, %43 : vector<1x16xf32>
    %59 = arith.addf %44, %45 : vector<1x16xf32>
    %60 = arith.addf %46, %47 : vector<1x16xf32>
    %61 = arith.addf %48, %49 : vector<1x16xf32>
    %62 = arith.addf %50, %51 : vector<1x16xf32>
    %63 = arith.addf %52, %53 : vector<1x16xf32>
    %64 = arith.addf %54, %55 : vector<1x16xf32>
    %65 = arith.addf %56, %57 : vector<1x16xf32>
    %66 = arith.addf %58, %59 : vector<1x16xf32>
    %67 = arith.addf %60, %61 : vector<1x16xf32>
    %68 = arith.addf %62, %63 : vector<1x16xf32>
    %69 = arith.addf %64, %65 : vector<1x16xf32>
    %70 = arith.addf %66, %67 : vector<1x16xf32>
    %71 = arith.addf %68, %69 : vector<1x16xf32>
    %72 = arith.addf %70, %71 : vector<1x16xf32>
    %c0_40 = arith.constant 0 : index
    %c0_41 = arith.constant 0 : index
    %73 = vector.load %arg5[%c0_40, %c0_41] : memref<1x16xf32, #tpu.memory_space<vmem>>, vector<1x16xf32>
    %74 = arith.addf %72, %73 : vector<1x16xf32>
    %75 = vector.extract_strided_slice %74 {offsets = [0, 0], sizes = [1, 10], strides = [1, 1]} : vector<1x16xf32> to vector<1x10xf32>
    %c0_42 = arith.constant 0 : index
    %c0_43 = arith.constant 0 : index
    %c0_44 = arith.constant 0 : index
    %76 = vector.load %arg6[%c0_42, %c0_43, %c0_44] : memref<1x1x10xf32, #tpu.memory_space<vmem>>, vector<1x1x10xf32>
    %77 = vector.shape_cast %76 : vector<1x1x10xf32> to vector<1x10xf32>
    %78 = vector.shape_cast %75 : vector<1x10xf32> to vector<1x1x10xf32>
    tpu.vector_store %arg6[%c0_42, %c0_43, %c0_44], %78 {strides = array<i32>} : memref<1x1x10xf32, #tpu.memory_space<vmem>>, vector<1x1x10xf32>,
    return
  }
  func.func @transform_0(%arg0: i32) -> (i32, i32, i32, i32) {
    %c0_i32 = arith.constant 0 : i32
    %c0_i32_0 = arith.constant 0 : i32
    %c0_i32_1 = arith.constant 0 : i32
    %c0_i32_2 = arith.constant 0 : i32
    return %arg0, %c0_i32, %c0_i32_0, %c0_i32_1 : i32, i32, i32, i32
  }
  func.func @transform_1(%arg0: i32) -> (i32, i32, i32) {
    %c0_i32 = arith.constant 0 : i32
    %c0_i32_0 = arith.constant 0 : i32
    %c0_i32_1 = arith.constant 0 : i32
    %c0_i32_2 = arith.constant 0 : i32
    return %c0_i32, %c0_i32_0, %c0_i32_1 : i32, i32, i32
  }
  func.func @transform_2(%arg0: i32) -> (i32, i32) {
    %c0_i32 = arith.constant 0 : i32
    %c0_i32_0 = arith.constant 0 : i32
    %c0_i32_1 = arith.constant 0 : i32
    return %c0_i32, %c0_i32_0 : i32, i32
  }
  func.func @transform_3(%arg0: i32) -> (i32, i32) {
    %c0_i32 = arith.constant 0 : i32
    %c0_i32_0 = arith.constant 0 : i32
    %c0_i32_1 = arith.constant 0 : i32
    return %c0_i32, %c0_i32_0 : i32, i32
  }
  func.func @transform_4(%arg0: i32) -> (i32, i32) {
    %c0_i32 = arith.constant 0 : i32
    %c0_i32_0 = arith.constant 0 : i32
    %c0_i32_1 = arith.constant 0 : i32
    return %c0_i32, %c0_i32_0 : i32, i32
  }
  func.func @transform_5(%arg0: i32) -> (i32, i32, i32) {
    %c0_i32 = arith.constant 0 : i32
    %c0_i32_0 = arith.constant 0 : i32
    %c0_i32_1 = arith.constant 0 : i32
    return %arg0, %c0_i32, %c0_i32_0 : i32, i32, i32
  }
}

</mosaic_0001>

<llo_original>
// kernel: convnet2_forward.1
$region0: #{convnet2_forward.1}
  #allocation0 [shape = 'u32[]', space=smem, size = 0x4, offset = 0x4, fixed_abs, tag = 'smem constant byte address 0x4 - core index']
  #allocation1 [shape = 'u32[144,128]{1,0:T(1,128)}', space=vmem, size = 0x12000, scoped, tag = 'internal scratch']
  %s0 = inlined_call_operand.vmem [shape: f32[2,5,32,128], index: 0, kind: input, shape index: {}]
  %s1 = inlined_call_operand.vmem [shape: f32[5,128,512], index: 1, kind: input, shape index: {}]
  %s2 = inlined_call_operand.vmem [shape: f32[1,256], index: 2, kind: input, shape index: {}]
  %s3 = inlined_call_operand.hbm [shape: f32[256,256], index: 3, kind: input, shape index: {}]
  %s4 = inlined_call_operand.vmem [shape: f32[1,16], index: 4, kind: input, shape index: {}]
  %s5 = inlined_call_operand.hbm [shape: f32[2,1,10], index: 5, kind: output, shape index: {}]
  %s6 = sld [smem:[#allocation0]]
  $region57: #{convnet2_forward.1} parent=0
    _
  %s8 = ssub.s32 1, %s6
  %s9 = scalar_select 0, %s8, %s6
  $region1: #{convnet2_forward.1} parent=0
    #allocation2 [shape = 'u8[262144]{0}', space=vmem, size = 0x40000, scoped, tag = 'input window, operand 3, single buffered']
    #allocation3 [shape = 's32[2]{0}', space=sflag, size = 0x8, scoped, tag = 'scoped memory for convnet2_forward.1']
    #allocation4 [shape = 's32[2]{0}', space=sflag, size = 0x8, scoped, tag = 'scoped memory for convnet2_forward.1']
    #allocation5 [shape = 'u8[1024]{0}', space=vmem, size = 0x400, scoped, tag = 'output window, operand 0']
    %10 = vsyncpa [#allocation3], 0
    %11 = vsyncpa [#allocation4], 0
    %s12 = scalar_lea.sflag [#allocation4], 1
    %13 = vsyncpa %s12, 0
    loop: start=0, step=1, limit=4
    $region2: #{convnet2_forward.1} parent=1 // loop_pre_header
      _
    $region3: #{convnet2_forward.1} parent=1 // loop_header
      %s15 = sphi 0, %s19
      %p16 = scmp.ge.s32.totalorder %s15, 4
      %s25 = sphi 0, %s27
      %s28 = sphi 0, %s25
      %s29 = sphi 0, %s28
      %s45 = sphi 0, %s29
      %s49 = sphi 0, %s49
      %s51 = sphi 0, %s49
      %s52 = sphi 0, %s51
      %s66 = sphi 0, %s52
      %s70 = sphi 0, %s70
      %s72 = sphi 0, %s70
      %s73 = sphi 0, %s72
      %s87 = sphi 0, %s73
      %s91 = sphi 0, %s91
      %s93 = sphi 0, %s91
      %s94 = sphi 0, %s93
      %s108 = sphi 0, %s94
      %s112 = sphi 0, %s112
      %s114 = sphi 0, %s112
      %s115 = sphi 0, %s114
      %s129 = sphi 0, %s115
      %s135 = sphi 0, %s137
      %s138 = sphi 0, %s135
      %s139 = sphi 0, %s138
      %s155 = sphi 0, %s139
    $region4: #{convnet2_forward.1} parent=1 // loop_header_branch
      %18 = sbr.rel (%p16) target = $region8
    $region5: #{convnet2_forward.1} parent=1 // loop_body
      %s20 = ssub.s32 %s15, 1
      %s21 = ssub.s32 %s15, 2
      %s22 = sadd.s32 %s15, 1
      %s23 = ssub.s32 %s15, %s22
      %p24 = scmp.eq.s32.totalorder %s23, 0
      %s26 = sadd.s32 %s25, 1
      %s27 = scalar_select %p24, %s25, %s26
      %p30 = pneg %p24
      %p31 = scmp.eq.s32.totalorder %s15, 1
      %p32 = por %p30, %p31
      %p33 = scmp.ne.s32.totalorder %s25, %s28
      %p34 = scmp.eq.s32.totalorder %s15, 0
      %p35 = por %p33, %p34
      %p36 = scmp.ne.s32.totalorder %s25, %s28
      %p37 = scmp.eq.s32.totalorder %s20, 1
      %p38 = por %p36, %p37
      %p39 = scmp.ne.s32.totalorder %s28, %s29
      %p40 = scmp.eq.s32.totalorder %s20, 0
      %p41 = por %p39, %p40
      %p42 = scmp.ne.s32.totalorder %s28, %s29
      %p43 = scmp.eq.s32.totalorder %s21, 1
      %p44 = por %p42, %p43
      %p46 = scmp.ne.s32.totalorder %s29, %s45
      %p47 = scmp.eq.s32.totalorder %s21, 0
      %p48 = por %p46, %p47
      %s50 = sadd.s32 %s49, 1
      %p53 = scmp.eq.s32.totalorder %s15, 1
      %p54 = scmp.ne.s32.totalorder %s49, %s51
      %p55 = scmp.eq.s32.totalorder %s15, 0
      %p56 = por %p54, %p55
      %p57 = scmp.ne.s32.totalorder %s49, %s51
      %p58 = scmp.eq.s32.totalorder %s20, 1
      %p59 = por %p57, %p58
      %p60 = scmp.ne.s32.totalorder %s51, %s52
      %p61 = scmp.eq.s32.totalorder %s20, 0
      %p62 = por %p60, %p61
      %p63 = scmp.ne.s32.totalorder %s51, %s52
      %p64 = scmp.eq.s32.totalorder %s21, 1
      %p65 = por %p63, %p64
      %p67 = scmp.ne.s32.totalorder %s52, %s66
      %p68 = scmp.eq.s32.totalorder %s21, 0
      %p69 = por %p67, %p68
      %s71 = sadd.s32 %s70, 1
      %p74 = scmp.eq.s32.totalorder %s15, 1
      %p75 = scmp.ne.s32.totalorder %s70, %s72
      %p76 = scmp.eq.s32.totalorder %s15, 0
      %p77 = por %p75, %p76
      %p78 = scmp.ne.s32.totalorder %s70, %s72
      %p79 = scmp.eq.s32.totalorder %s20, 1
      %p80 = por %p78, %p79
      %p81 = scmp.ne.s32.totalorder %s72, %s73
      %p82 = scmp.eq.s32.totalorder %s20, 0
      %p83 = por %p81, %p82
      %p84 = scmp.ne.s32.totalorder %s72, %s73
      %p85 = scmp.eq.s32.totalorder %s21, 1
      %p86 = por %p84, %p85
      %p88 = scmp.ne.s32.totalorder %s73, %s87
      %p89 = scmp.eq.s32.totalorder %s21, 0
      %p90 = por %p88, %p89
      %s92 = sadd.s32 %s91, 1
      %p95 = scmp.eq.s32.totalorder %s15, 1
      %p96 = scmp.ne.s32.totalorder %s91, %s93
      %p97 = scmp.eq.s32.totalorder %s15, 0
      %p98 = por %p96, %p97
      %p99 = scmp.ne.s32.totalorder %s91, %s93
      %p100 = scmp.eq.s32.totalorder %s20, 1
      %p101 = por %p99, %p100
      %p102 = scmp.ne.s32.totalorder %s93, %s94
      %p103 = scmp.eq.s32.totalorder %s20, 0
      %p104 = por %p102, %p103
      %p105 = scmp.ne.s32.totalorder %s93, %s94
      %p106 = scmp.eq.s32.totalorder %s21, 1
      %p107 = por %p105, %p106
      %p109 = scmp.ne.s32.totalorder %s94, %s108
      %p110 = scmp.eq.s32.totalorder %s21, 0
      %p111 = por %p109, %p110
      %s113 = sadd.s32 %s112, 1
      %p116 = scmp.eq.s32.totalorder %s15, 1
      %p117 = scmp.ne.s32.totalorder %s112, %s114
      %p118 = scmp.eq.s32.totalorder %s15, 0
      %p119 = por %p117, %p118
      %p120 = scmp.ne.s32.totalorder %s112, %s114
      %p121 = scmp.eq.s32.totalorder %s20, 1
      %p122 = por %p120, %p121
      %p123 = scmp.ne.s32.totalorder %s114, %s115
      %p124 = scmp.eq.s32.totalorder %s20, 0
      %p125 = por %p123, %p124
      %p126 = scmp.ne.s32.totalorder %s114, %s115
      %p127 = scmp.eq.s32.totalorder %s21, 1
      %p128 = por %p126, %p127
      %p130 = scmp.ne.s32.totalorder %s115, %s129
      %p131 = scmp.eq.s32.totalorder %s21, 0
      %p132 = por %p130, %p131
      %s133 = ssub.s32 %s15, %s22
      %p134 = scmp.eq.s32.totalorder %s133, 0
      %s136 = sadd.s32 %s135, 1
      %s137 = scalar_select %p134, %s135, %s136
      %p140 = pneg %p134
      %p141 = scmp.eq.s32.totalorder %s15, 1
      %p142 = por %p140, %p141
      %p143 = scmp.ne.s32.totalorder %s135, %s138
      %p144 = scmp.eq.s32.totalorder %s15, 0
      %p145 = por %p143, %p144
      %p146 = scmp.ne.s32.totalorder %s135, %s138
      %p147 = scmp.eq.s32.totalorder %s20, 1
      %p148 = por %p146, %p147
      %p149 = scmp.ne.s32.totalorder %s138, %s139
      %p150 = scmp.eq.s32.totalorder %s20, 0
      %p151 = por %p149, %p150
      %p152 = scmp.ne.s32.totalorder %s138, %s139
      %p153 = scmp.eq.s32.totalorder %s21, 1
      %p154 = por %p152, %p153
      %p156 = scmp.ne.s32.totalorder %s139, %s155
      %p157 = scmp.eq.s32.totalorder %s21, 0
      %p158 = por %p156, %p157
      %p159 = scmp.le.s32.totalorder 1, %s15
      %p160 = scmp.lt.s32.totalorder %s15, 3
      %p161 = pnand %p159, %p160
      %p162 = pneg %p161
      // Predicated region
      $region9: #{convnet2_forward.1} parent=5 // pred_check
        _
      $region10: #{convnet2_forward.1} parent=5 // pred_check_branch
        %164 = sbr.rel (%p161) target = $region12
      $region11: #{convnet2_forward.1} parent=5 // pred_region
        %s165 = ssub.s32 %s15, 1
        // Predicated region
        $region13: #{convnet2_forward.1} parent=11 // pred_check
          %p166 = pneg %p62
        $region14: #{convnet2_forward.1} parent=11 // pred_check_branch
          %168 = sbr.rel (%p166) target = $region16
        $region15: #{convnet2_forward.1} parent=11 // pred_region
          _
        $region16: #{convnet2_forward.1} parent=11 // pred_fallthru
          _
        // Predicated region
        $region17: #{convnet2_forward.1} parent=11 // pred_check
          %p169 = pneg %p83
        $region18: #{convnet2_forward.1} parent=11 // pred_check_branch
          %171 = sbr.rel (%p169) target = $region20
        $region19: #{convnet2_forward.1} parent=11 // pred_region
          _
        $region20: #{convnet2_forward.1} parent=11 // pred_fallthru
          _
        // Predicated region
        $region21: #{convnet2_forward.1} parent=11 // pred_check
          %p172 = pneg %p104
        $region22: #{convnet2_forward.1} parent=11 // pred_check_branch
          %174 = sbr.rel (%p172) target = $region24
        $region23: #{convnet2_forward.1} parent=11 // pred_region
          %s176 = ssub.s32 8192, 8192
          %177 = vsyncadd [#allocation3], %s176
          %s178 = sshll.u32 [#allocation2], 4
          %s179 = int_to_ptr.vmem [resolvable:$true] %s178
          %184 = dma.hbm_to_vmem [thread:$0]  %s3, 8192, %s179, [#allocation3], 256, 256, 16
        $region24: #{convnet2_forward.1} parent=11 // pred_fallthru
          _
        // Predicated region
        $region25: #{convnet2_forward.1} parent=11 // pred_check
          %p185 = pneg %p125
        $region26: #{convnet2_forward.1} parent=11 // pred_check_branch
          %187 = sbr.rel (%p185) target = $region28
        $region27: #{convnet2_forward.1} parent=11 // pred_region
          _
        $region28: #{convnet2_forward.1} parent=11 // pred_fallthru
          _
      $region12: #{convnet2_forward.1} parent=5 // pred_fallthru
        _
      %p188 = scmp.lt.s32.totalorder %s15, 2
      // Predicated region
      $region29: #{convnet2_forward.1} parent=5 // pred_check
        %p189 = pneg %p188
      $region30: #{convnet2_forward.1} parent=5 // pred_check_branch
        %191 = sbr.rel (%p189) target = $region32
      $region31: #{convnet2_forward.1} parent=5 // pred_region
        // Predicated region
        $region33: #{convnet2_forward.1} parent=31 // pred_check
          %p192 = pneg %p35
        $region34: #{convnet2_forward.1} parent=31 // pred_check_branch
          %194 = sbr.rel (%p192) target = $region36
        $region35: #{convnet2_forward.1} parent=31 // pred_region
          %p195 = scmp.lt.s32.totalorder %s15, 1
          %s196 = scalar_select %p195, %s15, 1
          %s197 = smul.addr %s196, 20
          %s198 = smul.addr %s197, 8
          %s199 = scalar_lea.vmem %s0, %s198
        $region36: #{convnet2_forward.1} parent=31 // pred_fallthru
          _
      $region32: #{convnet2_forward.1} parent=5 // pred_fallthru
        _
      %p200 = scmp.le.s32.totalorder 1, %s15
      %p201 = scmp.lt.s32.totalorder %s15, 3
      %p202 = pnand %p200, %p201
      %p203 = pneg %p202
      // Predicated region
      $region37: #{convnet2_forward.1} parent=5 // pred_check
        _
      $region38: #{convnet2_forward.1} parent=5 // pred_check_branch
        %205 = sbr.rel (%p202) target = $region40
      $region39: #{convnet2_forward.1} parent=5 // pred_region
        %s206 = ssub.s32 %s15, 1
        // Predicated region
        $region41: #{convnet2_forward.1} parent=39 // pred_check
          %p207 = pneg %p104
        $region42: #{convnet2_forward.1} parent=39 // pred_check_branch
          %209 = sbr.rel (%p207) target = $region44
        $region43: #{convnet2_forward.1} parent=39 // pred_region
          %210 = dma.done [#allocation3], 8192
        $region44: #{convnet2_forward.1} parent=39 // pred_fallthru
          _
        %p211 = scmp.lt.s32.totalorder %s20, 1
        %s212 = scalar_select %p211, %s20, 1
        %s213 = smul.addr %s212, 20
        %s214 = smul.addr %s213, 8
        %s215 = scalar_lea.vmem %s0, %s214
        %p216 = pneg %p41
        %p217 = pneg %p38
        %p218 = pneg %p62
        %p219 = pneg %p59
        %p220 = pneg %p83
        %p221 = pneg %p80
        %p222 = pneg %p104
        %p223 = pneg %p101
        %p224 = pneg %p125
        %p225 = pneg %p122
        %p226 = pneg %p151
        %p227 = pneg %p148
        %s228 = sand.u32 %s138, 1
        %s229 = scalar_lea.sflag [#allocation4], %s228
        %s230 = sand.u32 %s138, 1
        %s231 = scalar_lea.vmem [#allocation5], %s230
        %p232 = scmp.lt.s32.totalorder %s20, 1
        %s233 = scalar_select %p232, %s20, 1
        %s234 = smul.addr %s233, 20
        %s235 = smul.addr %s234, 8
        %s236 = scalar_lea.vmem %s0, %s235
        %v237 = vld [vmem:[%s236] sm:$0xff]
        %v238 = vld [vmem:[%s236 + $0x8] sm:$0xff]
        %v239 = vld [vmem:[%s236 + $0x10] sm:$0xff]
        %v240 = vld [vmem:[%s236 + $0x18] sm:$0xff]
        %v241 = vld [vmem:[%s1] sm:$0xff]
        %v242 = vld [vmem:[%s1 + $0x8] sm:$0xff]
        %v243 = vld [vmem:[%s1 + $0x10] sm:$0xff]
        %v244 = vld [vmem:[%s1 + $0x18] sm:$0xff]
        %v245 = vld [vmem:[%s1 + $0x20] sm:$0xff]
        %v246 = vld [vmem:[%s1 + $0x28] sm:$0xff]
        %v247 = vld [vmem:[%s1 + $0x30] sm:$0xff]
        %v248 = vld [vmem:[%s1 + $0x38] sm:$0xff]
        %v249 = vld [vmem:[%s1 + $0x40] sm:$0xff]
        %v250 = vld [vmem:[%s1 + $0x48] sm:$0xff]
        %v251 = vld [vmem:[%s1 + $0x50] sm:$0xff]
        %v252 = vld [vmem:[%s1 + $0x58] sm:$0xff]
        %v253 = vld [vmem:[%s1 + $0x60] sm:$0xff]
        %v254 = vld [vmem:[%s1 + $0x68] sm:$0xff]
        %v255 = vld [vmem:[%s1 + $0x70] sm:$0xff]
        %v256 = vld [vmem:[%s1 + $0x78] sm:$0xff]
        %v257 = vld [vmem:[%s1 + $0x80] sm:$0xff]
        %v258 = vld [vmem:[%s1 + $0x88] sm:$0xff]
        %v259 = vld [vmem:[%s1 + $0x90] sm:$0xff]
        %v260 = vld [vmem:[%s1 + $0x98] sm:$0xff]
        %v261 = vld [vmem:[%s1 + $0xa0] sm:$0xff]
        %v262 = vld [vmem:[%s1 + $0xa8] sm:$0xff]
        %v263 = vld [vmem:[%s1 + $0xb0] sm:$0xff]
        %v264 = vld [vmem:[%s1 + $0xb8] sm:$0xff]
        %v265 = vld [vmem:[%s1 + $0xc0] sm:$0xff]
        %v266 = vld [vmem:[%s1 + $0xc8] sm:$0xff]
        %v267 = vld [vmem:[%s1 + $0xd0] sm:$0xff]
        %v268 = vld [vmem:[%s1 + $0xd8] sm:$0xff]
        %v269 = vld [vmem:[%s1 + $0xe0] sm:$0xff]
        %v270 = vld [vmem:[%s1 + $0xe8] sm:$0xff]
        %v271 = vld [vmem:[%s1 + $0xf0] sm:$0xff]
        %v272 = vld [vmem:[%s1 + $0xf8] sm:$0xff]
        %v273 = vld [vmem:[%s1 + $0x100] sm:$0xff]
        %v274 = vld [vmem:[%s1 + $0x108] sm:$0xff]
        %v275 = vld [vmem:[%s1 + $0x110] sm:$0xff]
        %v276 = vld [vmem:[%s1 + $0x118] sm:$0xff]
        %v277 = vld [vmem:[%s1 + $0x120] sm:$0xff]
        %v278 = vld [vmem:[%s1 + $0x128] sm:$0xff]
        %v279 = vld [vmem:[%s1 + $0x130] sm:$0xff]
        %v280 = vld [vmem:[%s1 + $0x138] sm:$0xff]
        %v281 = vld [vmem:[%s1 + $0x140] sm:$0xff]
        %v282 = vld [vmem:[%s1 + $0x148] sm:$0xff]
        %v283 = vld [vmem:[%s1 + $0x150] sm:$0xff]
        %v284 = vld [vmem:[%s1 + $0x158] sm:$0xff]
        %v285 = vld [vmem:[%s1 + $0x160] sm:$0xff]
        %v286 = vld [vmem:[%s1 + $0x168] sm:$0xff]
        %v287 = vld [vmem:[%s1 + $0x170] sm:$0xff]
        %v288 = vld [vmem:[%s1 + $0x178] sm:$0xff]
        %v289 = vld [vmem:[%s1 + $0x180] sm:$0xff]
        %v290 = vld [vmem:[%s1 + $0x188] sm:$0xff]
        %v291 = vld [vmem:[%s1 + $0x190] sm:$0xff]
        %v292 = vld [vmem:[%s1 + $0x198] sm:$0xff]
        %v293 = vld [vmem:[%s1 + $0x1a0] sm:$0xff]
        %v294 = vld [vmem:[%s1 + $0x1a8] sm:$0xff]
        %v295 = vld [vmem:[%s1 + $0x1b0] sm:$0xff]
        %v296 = vld [vmem:[%s1 + $0x1b8] sm:$0xff]
        %v297 = vld [vmem:[%s1 + $0x1c0] sm:$0xff]
        %v298 = vld [vmem:[%s1 + $0x1c8] sm:$0xff]
        %v299 = vld [vmem:[%s1 + $0x1d0] sm:$0xff]
        %v300 = vld [vmem:[%s1 + $0x1d8] sm:$0xff]
        %v301 = vld [vmem:[%s1 + $0x1e0] sm:$0xff]
        %v302 = vld [vmem:[%s1 + $0x1e8] sm:$0xff]
        %v303 = vld [vmem:[%s1 + $0x1f0] sm:$0xff]
        %v304 = vld [vmem:[%s1 + $0x1f8] sm:$0xff]
        %s305 = scalar_lea.vmem %s236, 32
        %v306 = vld [vmem:[%s305] sm:$0xff]
        %v307 = vld [vmem:[%s305 + $0x8] sm:$0xff]
        %v308 = vld [vmem:[%s305 + $0x10] sm:$0xff]
        %v309 = vld [vmem:[%s305 + $0x18] sm:$0xff]
        %s310 = scalar_lea.vmem %s1, 512
        %v311 = vld [vmem:[%s310] sm:$0xff]
        %v312 = vld [vmem:[%s310 + $0x8] sm:$0xff]
        %v313 = vld [vmem:[%s310 + $0x10] sm:$0xff]
        %v314 = vld [vmem:[%s310 + $0x18] sm:$0xff]
        %v315 = vld [vmem:[%s310 + $0x20] sm:$0xff]
        %v316 = vld [vmem:[%s310 + $0x28] sm:$0xff]
        %v317 = vld [vmem:[%s310 + $0x30] sm:$0xff]
        %v318 = vld [vmem:[%s310 + $0x38] sm:$0xff]
        %v319 = vld [vmem:[%s310 + $0x40] sm:$0xff]
        %v320 = vld [vmem:[%s310 + $0x48] sm:$0xff]
        %v321 = vld [vmem:[%s310 + $0x50] sm:$0xff]
        %v322 = vld [vmem:[%s310 + $0x58] sm:$0xff]
        %v323 = vld [vmem:[%s310 + $0x60] sm:$0xff]
        %v324 = vld [vmem:[%s310 + $0x68] sm:$0xff]
        %v325 = vld [vmem:[%s310 + $0x70] sm:$0xff]
        %v326 = vld [vmem:[%s310 + $0x78] sm:$0xff]
        %v327 = vld [vmem:[%s310 + $0x80] sm:$0xff]
        %v328 = vld [vmem:[%s310 + $0x88] sm:$0xff]
        %v329 = vld [vmem:[%s310 + $0x90] sm:$0xff]
        %v330 = vld [vmem:[%s310 + $0x98] sm:$0xff]
        %v331 = vld [vmem:[%s310 + $0xa0] sm:$0xff]
        %v332 = vld [vmem:[%s310 + $0xa8] sm:$0xff]
        %v333 = vld [vmem:[%s310 + $0xb0] sm:$0xff]
        %v334 = vld [vmem:[%s310 + $0xb8] sm:$0xff]
        %v335 = vld [vmem:[%s310 + $0xc0] sm:$0xff]
        %v336 = vld [vmem:[%s310 + $0xc8] sm:$0xff]
        %v337 = vld [vmem:[%s310 + $0xd0] sm:$0xff]
        %v338 = vld [vmem:[%s310 + $0xd8] sm:$0xff]
        %v339 = vld [vmem:[%s310 + $0xe0] sm:$0xff]
        %v340 = vld [vmem:[%s310 + $0xe8] sm:$0xff]
        %v341 = vld [vmem:[%s310 + $0xf0] sm:$0xff]
        %v342 = vld [vmem:[%s310 + $0xf8] sm:$0xff]
        %v343 = vld [vmem:[%s310 + $0x100] sm:$0xff]
        %v344 = vld [vmem:[%s310 + $0x108] sm:$0xff]
        %v345 = vld [vmem:[%s310 + $0x110] sm:$0xff]
        %v346 = vld [vmem:[%s310 + $0x118] sm:$0xff]
        %v347 = vld [vmem:[%s310 + $0x120] sm:$0xff]
        %v348 = vld [vmem:[%s310 + $0x128] sm:$0xff]
        %v349 = vld [vmem:[%s310 + $0x130] sm:$0xff]
        %v350 = vld [vmem:[%s310 + $0x138] sm:$0xff]
        %v351 = vld [vmem:[%s310 + $0x140] sm:$0xff]
        %v352 = vld [vmem:[%s310 + $0x148] sm:$0xff]
        %v353 = vld [vmem:[%s310 + $0x150] sm:$0xff]
        %v354 = vld [vmem:[%s310 + $0x158] sm:$0xff]
        %v355 = vld [vmem:[%s310 + $0x160] sm:$0xff]
        %v356 = vld [vmem:[%s310 + $0x168] sm:$0xff]
        %v357 = vld [vmem:[%s310 + $0x170] sm:$0xff]
        %v358 = vld [vmem:[%s310 + $0x178] sm:$0xff]
        %v359 = vld [vmem:[%s310 + $0x180] sm:$0xff]
        %v360 = vld [vmem:[%s310 + $0x188] sm:$0xff]
        %v361 = vld [vmem:[%s310 + $0x190] sm:$0xff]
        %v362 = vld [vmem:[%s310 + $0x198] sm:$0xff]
        %v363 = vld [vmem:[%s310 + $0x1a0] sm:$0xff]
        %v364 = vld [vmem:[%s310 + $0x1a8] sm:$0xff]
        %v365 = vld [vmem:[%s310 + $0x1b0] sm:$0xff]
        %v366 = vld [vmem:[%s310 + $0x1b8] sm:$0xff]
        %v367 = vld [vmem:[%s310 + $0x1c0] sm:$0xff]
        %v368 = vld [vmem:[%s310 + $0x1c8] sm:$0xff]
        %v369 = vld [vmem:[%s310 + $0x1d0] sm:$0xff]
        %v370 = vld [vmem:[%s310 + $0x1d8] sm:$0xff]
        %v371 = vld [vmem:[%s310 + $0x1e0] sm:$0xff]
        %v372 = vld [vmem:[%s310 + $0x1e8] sm:$0xff]
        %v373 = vld [vmem:[%s310 + $0x1f0] sm:$0xff]
        %v374 = vld [vmem:[%s310 + $0x1f8] sm:$0xff]
        %375 = vmatprep.subr.mxu0 %v372
        %376 = vmatpush1.msra.mxu0 %v371
        %377 = vmatprep.subr.mxu0 %v368
        %378 = vmatpush1.msra.mxu0 %v367
        %379 = vmatprep.subr.mxu0 %v364
        %380 = vmatpush1.msra.mxu0 %v363
        %381 = vmatprep.subr.mxu0 %v360
        %382 = vmatpush1.msra.mxu0 %v359
        %383 = vmatprep.subr.mxu0 %v356
        %384 = vmatpush1.msra.mxu0 %v355
        %385 = vmatprep.subr.mxu0 %v352
        %386 = vmatpush1.msra.mxu0 %v351
        %387 = vmatprep.subr.mxu0 %v348
        %388 = vmatpush1.msra.mxu0 %v347
        %389 = vmatprep.subr.mxu0 %v344
        %390 = vmatpush1.msra.mxu0 %v343
        %391 = vmatprep.subr.mxu0 %v340
        %392 = vmatpush1.msra.mxu0 %v339
        %393 = vmatprep.subr.mxu0 %v336
        %394 = vmatpush1.msra.mxu0 %v335
        %395 = vmatprep.subr.mxu0 %v332
        %396 = vmatpush1.msra.mxu0 %v331
        %397 = vmatprep.subr.mxu0 %v328
        %398 = vmatpush1.msra.mxu0 %v327
        %399 = vmatprep.subr.mxu0 %v324
        %400 = vmatpush1.msra.mxu0 %v323
        %401 = vmatprep.subr.mxu0 %v320
        %402 = vmatpush1.msra.mxu0 %v319
        %403 = vmatprep.subr.mxu0 %v316
        %404 = vmatpush1.msra.mxu0 %v315
        %405 = vmatprep.subr.mxu0 %v312
        %406 = vmatpush1.msra.mxu0 %v311
        %407 = vmatprep.subr.mxu0 0.0
        %408 = vmatpush2.msra.mxu0 0.0
        %409 = vmatprep.subr.mxu0 0.0
        %410 = vmatpush2.msra.mxu0 0.0
        %411 = vmatprep.subr.mxu0 0.0
        %412 = vmatpush2.msra.mxu0 0.0
        %413 = vmatprep.subr.mxu0 0.0
        %414 = vmatpush2.msra.mxu0 0.0
        %415 = vmatprep.subr.mxu0 0.0
        %416 = vmatpush2.msra.mxu0 0.0
        %417 = vmatprep.subr.mxu0 0.0
        %418 = vmatpush2.msra.mxu0 0.0
        %419 = vmatprep.subr.mxu0 0.0
        %420 = vmatpush2.msra.mxu0 0.0
        %421 = vmatprep.subr.mxu0 0.0
        %422 = vmatpush2.msra.mxu0 0.0
        %423 = vmatprep.subr.mxu0 0.0
        %424 = vmatpush2.msra.mxu0 0.0
        %425 = vmatprep.subr.mxu0 0.0
        %426 = vmatpush2.msra.mxu0 0.0
        %427 = vmatprep.subr.mxu0 0.0
        %428 = vmatpush2.msra.mxu0 0.0
        %429 = vmatprep.subr.mxu0 0.0
        %430 = vmatpush2.msra.mxu0 0.0
        %431 = vmatprep.subr.mxu0 0.0
        %432 = vmatpush2.msra.mxu0 0.0
        %433 = vmatprep.subr.mxu0 0.0
        %434 = vmatpush2.msra.mxu0 0.0
        %435 = vmatprep.subr.mxu0 0.0
        %436 = vmatpush2.msra.mxu0 0.0
        %437 = vmatprep.subr.mxu0 0.0
        %438 = vmatpush2.msra.mxu0 0.0
        %439 = vmatprep.mubr.f32.mxu0 0.0
        %440 = vmatmul.mubr.f32.gmra.mxu0 %v306
        %v441 = vpop.f32.mrf.mxu0
        %v442 = vadd.f32 0.0, %v441
        %v443 = vpop.f32.mrf.mxu0
        %v444 = vadd.f32 0.0, %v443
        %445 = vmatprep.mubr.f32.mxu0 0.0
        %446 = vmatmul.mubr.f32.gmra.mxu0 %v307
        %v447 = vpop.f32.mrf.mxu0
        %v448 = vadd.f32 0.0, %v447
        %v449 = vpop.f32.mrf.mxu0
        %v450 = vadd.f32 0.0, %v449
        %451 = vmatprep.mubr.f32.mxu0 0.0
        %452 = vmatmul.mubr.f32.gmra.mxu0 %v308
        %v453 = vpop.f32.mrf.mxu0
        %v454 = vadd.f32 0.0, %v453
        %v455 = vpop.f32.mrf.mxu0
        %v456 = vadd.f32 0.0, %v455
        %457 = vmatprep.mubr.f32.mxu0 0.0
        %458 = vmatmul.mubr.f32.gmra.mxu0 %v309
        %v459 = vpop.f32.mrf.mxu0
        %v460 = vadd.f32 0.0, %v459
        %v461 = vpop.f32.mrf.mxu0
        %v462 = vadd.f32 0.0, %v461
        %463 = vdwg.mxu0
        %464 = vmatprep.subr.mxu0 %v374
        %465 = vmatpush1.msra.mxu0 %v373
        %466 = vmatprep.subr.mxu0 %v370
        %467 = vmatpush1.msra.mxu0 %v369
        %468 = vmatprep.subr.mxu0 %v366
        %469 = vmatpush1.msra.mxu0 %v365
        %470 = vmatprep.subr.mxu0 %v362
        %471 = vmatpush1.msra.mxu0 %v361
        %472 = vmatprep.subr.mxu0 %v358
        %473 = vmatpush1.msra.mxu0 %v357
        %474 = vmatprep.subr.mxu0 %v354
        %475 = vmatpush1.msra.mxu0 %v353
        %476 = vmatprep.subr.mxu0 %v350
        %477 = vmatpush1.msra.mxu0 %v349
        %478 = vmatprep.subr.mxu0 %v346
        %479 = vmatpush1.msra.mxu0 %v345
        %480 = vmatprep.subr.mxu0 %v342
        %481 = vmatpush1.msra.mxu0 %v341
        %482 = vmatprep.subr.mxu0 %v338
        %483 = vmatpush1.msra.mxu0 %v337
        %484 = vmatprep.subr.mxu0 %v334
        %485 = vmatpush1.msra.mxu0 %v333
        %486 = vmatprep.subr.mxu0 %v330
        %487 = vmatpush1.msra.mxu0 %v329
        %488 = vmatprep.subr.mxu0 %v326
        %489 = vmatpush1.msra.mxu0 %v325
        %490 = vmatprep.subr.mxu0 %v322
        %491 = vmatpush1.msra.mxu0 %v321
        %492 = vmatprep.subr.mxu0 %v318
        %493 = vmatpush1.msra.mxu0 %v317
        %494 = vmatprep.subr.mxu0 %v314
        %495 = vmatpush1.msra.mxu0 %v313
        %496 = vmatprep.subr.mxu0 0.0
        %497 = vmatpush2.msra.mxu0 0.0
        %498 = vmatprep.subr.mxu0 0.0
        %499 = vmatpush2.msra.mxu0 0.0
        %500 = vmatprep.subr.mxu0 0.0
        %501 = vmatpush2.msra.mxu0 0.0
        %502 = vmatprep.subr.mxu0 0.0
        %503 = vmatpush2.msra.mxu0 0.0
        %504 = vmatprep.subr.mxu0 0.0
        %505 = vmatpush2.msra.mxu0 0.0
        %506 = vmatprep.subr.mxu0 0.0
        %507 = vmatpush2.msra.mxu0 0.0
        %508 = vmatprep.subr.mxu0 0.0
        %509 = vmatpush2.msra.mxu0 0.0
        %510 = vmatprep.subr.mxu0 0.0
        %511 = vmatpush2.msra.mxu0 0.0
        %512 = vmatprep.subr.mxu0 0.0
        %513 = vmatpush2.msra.mxu0 0.0
        %514 = vmatprep.subr.mxu0 0.0
        %515 = vmatpush2.msra.mxu0 0.0
        %516 = vmatprep.subr.mxu0 0.0
        %517 = vmatpush2.msra.mxu0 0.0
        %518 = vmatprep.subr.mxu0 0.0
        %519 = vmatpush2.msra.mxu0 0.0
        %520 = vmatprep.subr.mxu0 0.0
        %521 = vmatpush2.msra.mxu0 0.0
        %522 = vmatprep.subr.mxu0 0.0
        %523 = vmatpush2.msra.mxu0 0.0
        %524 = vmatprep.subr.mxu0 0.0
        %525 = vmatpush2.msra.mxu0 0.0
        %526 = vmatprep.subr.mxu0 0.0
        %527 = vmatpush2.msra.mxu0 0.0
        %528 = vmatprep.mubr.f32.mxu0 0.0
        %529 = vmatmul.mubr.f32.gmra.mxu0 %v306
        %v530 = vpop.f32.mrf.mxu0
        %v531 = vadd.f32 0.0, %v530
        %v532 = vpop.f32.mrf.mxu0
        %v533 = vadd.f32 0.0, %v532
        %534 = vmatprep.mubr.f32.mxu0 0.0
        %535 = vmatmul.mubr.f32.gmra.mxu0 %v307
        %v536 = vpop.f32.mrf.mxu0
        %v537 = vadd.f32 0.0, %v536
        %v538 = vpop.f32.mrf.mxu0
        %v539 = vadd.f32 0.0, %v538
        %540 = vmatprep.mubr.f32.mxu0 0.0
        %541 = vmatmul.mubr.f32.gmra.mxu0 %v308
        %v542 = vpop.f32.mrf.mxu0
        %v543 = vadd.f32 0.0, %v542
        %v544 = vpop.f32.mrf.mxu0
        %v545 = vadd.f32 0.0, %v544
        %546 = vmatprep.mubr.f32.mxu0 0.0
        %547 = vmatmul.mubr.f32.gmra.mxu0 %v309
        %v548 = vpop.f32.mrf.mxu0
        %v549 = vadd.f32 0.0, %v548
        %v550 = vpop.f32.mrf.mxu0
        %v551 = vadd.f32 0.0, %v550
        %552 = vdwg.mxu0
        %553 = vmatprep.subr.mxu0 %v302
        %554 = vmatpush1.msra.mxu0 %v301
        %555 = vmatprep.subr.mxu0 %v298
        %556 = vmatpush1.msra.mxu0 %v297
        %557 = vmatprep.subr.mxu0 %v294
        %558 = vmatpush1.msra.mxu0 %v293
        %559 = vmatprep.subr.mxu0 %v290
        %560 = vmatpush1.msra.mxu0 %v289
        %561 = vmatprep.subr.mxu0 %v286
        %562 = vmatpush1.msra.mxu0 %v285
        %563 = vmatprep.subr.mxu0 %v282
        %564 = vmatpush1.msra.mxu0 %v281
        %565 = vmatprep.subr.mxu0 %v278
        %566 = vmatpush1.msra.mxu0 %v277
        %567 = vmatprep.subr.mxu0 %v274
        %568 = vmatpush1.msra.mxu0 %v273
        %569 = vmatprep.subr.mxu0 %v270
        %570 = vmatpush1.msra.mxu0 %v269
        %571 = vmatprep.subr.mxu0 %v266
        %572 = vmatpush1.msra.mxu0 %v265
        %573 = vmatprep.subr.mxu0 %v262
        %574 = vmatpush1.msra.mxu0 %v261
        %575 = vmatprep.subr.mxu0 %v258
        %576 = vmatpush1.msra.mxu0 %v257
        %577 = vmatprep.subr.mxu0 %v254
        %578 = vmatpush1.msra.mxu0 %v253
        %579 = vmatprep.subr.mxu0 %v250
        %580 = vmatpush1.msra.mxu0 %v249
        %581 = vmatprep.subr.mxu0 %v246
        %582 = vmatpush1.msra.mxu0 %v245
        %583 = vmatprep.subr.mxu0 %v242
        %584 = vmatpush1.msra.mxu0 %v241
        %585 = vmatprep.subr.mxu0 0.0
        %586 = vmatpush2.msra.mxu0 0.0
        %587 = vmatprep.subr.mxu0 0.0
        %588 = vmatpush2.msra.mxu0 0.0
        %589 = vmatprep.subr.mxu0 0.0
        %590 = vmatpush2.msra.mxu0 0.0
        %591 = vmatprep.subr.mxu0 0.0
        %592 = vmatpush2.msra.mxu0 0.0
        %593 = vmatprep.subr.mxu0 0.0
        %594 = vmatpush2.msra.mxu0 0.0
        %595 = vmatprep.subr.mxu0 0.0
        %596 = vmatpush2.msra.mxu0 0.0
        %597 = vmatprep.subr.mxu0 0.0
        %598 = vmatpush2.msra.mxu0 0.0
        %599 = vmatprep.subr.mxu0 0.0
        %600 = vmatpush2.msra.mxu0 0.0
        %601 = vmatprep.subr.mxu0 0.0
        %602 = vmatpush2.msra.mxu0 0.0
        %603 = vmatprep.subr.mxu0 0.0
        %604 = vmatpush2.msra.mxu0 0.0
        %605 = vmatprep.subr.mxu0 0.0
        %606 = vmatpush2.msra.mxu0 0.0
        %607 = vmatprep.subr.mxu0 0.0
        %608 = vmatpush2.msra.mxu0 0.0
        %609 = vmatprep.subr.mxu0 0.0
        %610 = vmatpush2.msra.mxu0 0.0
        %611 = vmatprep.subr.mxu0 0.0
        %612 = vmatpush2.msra.mxu0 0.0
        %613 = vmatprep.subr.mxu0 0.0
        %614 = vmatpush2.msra.mxu0 0.0
        %615 = vmatprep.subr.mxu0 0.0
        %616 = vmatpush2.msra.mxu0 0.0
        %617 = vmatprep.mubr.f32.mxu0 0.0
        %618 = vmatmul.mubr.f32.gmra.mxu0 %v237
        %v619 = vpop.f32.mrf.mxu0
        %v620 = vadd.f32 %v442, %v619
        %v621 = vpop.f32.mrf.mxu0
        %v622 = vadd.f32 %v444, %v621
        %623 = vmatprep.mubr.f32.mxu0 0.0
        %624 = vmatmul.mubr.f32.gmra.mxu0 %v238
        %v625 = vpop.f32.mrf.mxu0
        %v626 = vadd.f32 %v448, %v625
        %v627 = vpop.f32.mrf.mxu0
        %v628 = vadd.f32 %v450, %v627
        %629 = vmatprep.mubr.f32.mxu0 0.0
        %630 = vmatmul.mubr.f32.gmra.mxu0 %v239
        %v631 = vpop.f32.mrf.mxu0
        %v632 = vadd.f32 %v454, %v631
        %v633 = vpop.f32.mrf.mxu0
        %v634 = vadd.f32 %v456, %v633
        %635 = vmatprep.mubr.f32.mxu0 0.0
        %636 = vmatmul.mubr.f32.gmra.mxu0 %v240
        %v637 = vpop.f32.mrf.mxu0
        %v638 = vadd.f32 %v460, %v637
        %v639 = vpop.f32.mrf.mxu0
        %v640 = vadd.f32 %v462, %v639
        %641 = vdwg.mxu0
        %642 = vmatprep.subr.mxu0 %v304
        %643 = vmatpush1.msra.mxu0 %v303
        %644 = vmatprep.subr.mxu0 %v300
        %645 = vmatpush1.msra.mxu0 %v299
        %646 = vmatprep.subr.mxu0 %v296
        %647 = vmatpush1.msra.mxu0 %v295
        %648 = vmatprep.subr.mxu0 %v292
        %649 = vmatpush1.msra.mxu0 %v291
        %650 = vmatprep.subr.mxu0 %v288
        %651 = vmatpush1.msra.mxu0 %v287
        %652 = vmatprep.subr.mxu0 %v284
        %653 = vmatpush1.msra.mxu0 %v283
        %654 = vmatprep.subr.mxu0 %v280
        %655 = vmatpush1.msra.mxu0 %v279
        %656 = vmatprep.subr.mxu0 %v276
        %657 = vmatpush1.msra.mxu0 %v275
        %658 = vmatprep.subr.mxu0 %v272
        %659 = vmatpush1.msra.mxu0 %v271
        %660 = vmatprep.subr.mxu0 %v268
        %661 = vmatpush1.msra.mxu0 %v267
        %662 = vmatprep.subr.mxu0 %v264
        %663 = vmatpush1.msra.mxu0 %v263
        %664 = vmatprep.subr.mxu0 %v260
        %665 = vmatpush1.msra.mxu0 %v259
        %666 = vmatprep.subr.mxu0 %v256
        %667 = vmatpush1.msra.mxu0 %v255
        %668 = vmatprep.subr.mxu0 %v252
        %669 = vmatpush1.msra.mxu0 %v251
        %670 = vmatprep.subr.mxu0 %v248
        %671 = vmatpush1.msra.mxu0 %v247
        %672 = vmatprep.subr.mxu0 %v244
        %673 = vmatpush1.msra.mxu0 %v243
        %674 = vmatprep.subr.mxu0 0.0
        %675 = vmatpush2.msra.mxu0 0.0
        %676 = vmatprep.subr.mxu0 0.0
        %677 = vmatpush2.msra.mxu0 0.0
        %678 = vmatprep.subr.mxu0 0.0
        %679 = vmatpush2.msra.mxu0 0.0
        %680 = vmatprep.subr.mxu0 0.0
        %681 = vmatpush2.msra.mxu0 0.0
        %682 = vmatprep.subr.mxu0 0.0
        %683 = vmatpush2.msra.mxu0 0.0
        %684 = vmatprep.subr.mxu0 0.0
        %685 = vmatpush2.msra.mxu0 0.0
        %686 = vmatprep.subr.mxu0 0.0
        %687 = vmatpush2.msra.mxu0 0.0
        %688 = vmatprep.subr.mxu0 0.0
        %689 = vmatpush2.msra.mxu0 0.0
        %690 = vmatprep.subr.mxu0 0.0
        %691 = vmatpush2.msra.mxu0 0.0
        %692 = vmatprep.subr.mxu0 0.0
        %693 = vmatpush2.msra.mxu0 0.0
        %694 = vmatprep.subr.mxu0 0.0
        %695 = vmatpush2.msra.mxu0 0.0
        %696 = vmatprep.subr.mxu0 0.0
        %697 = vmatpush2.msra.mxu0 0.0
        %698 = vmatprep.subr.mxu0 0.0
        %699 = vmatpush2.msra.mxu0 0.0
        %700 = vmatprep.subr.mxu0 0.0
        %701 = vmatpush2.msra.mxu0 0.0
        %702 = vmatprep.subr.mxu0 0.0
        %703 = vmatpush2.msra.mxu0 0.0
        %704 = vmatprep.subr.mxu0 0.0
        %705 = vmatpush2.msra.mxu0 0.0
        %706 = vmatprep.mubr.f32.mxu0 0.0
        %707 = vmatmul.mubr.f32.gmra.mxu0 %v237
        %v708 = vpop.f32.mrf.mxu0
        %v709 = vadd.f32 %v531, %v708
        %v710 = vpop.f32.mrf.mxu0
        %v711 = vadd.f32 %v533, %v710
        %712 = vmatprep.mubr.f32.mxu0 0.0
        %713 = vmatmul.mubr.f32.gmra.mxu0 %v238
        %v714 = vpop.f32.mrf.mxu0
        %v715 = vadd.f32 %v537, %v714
        %v716 = vpop.f32.mrf.mxu0
        %v717 = vadd.f32 %v539, %v716
        %718 = vmatprep.mubr.f32.mxu0 0.0
        %719 = vmatmul.mubr.f32.gmra.mxu0 %v239
        %v720 = vpop.f32.mrf.mxu0
        %v721 = vadd.f32 %v543, %v720
        %v722 = vpop.f32.mrf.mxu0
        %v723 = vadd.f32 %v545, %v722
        %724 = vmatprep.mubr.f32.mxu0 0.0
        %725 = vmatmul.mubr.f32.gmra.mxu0 %v240
        %v726 = vpop.f32.mrf.mxu0
        %v727 = vadd.f32 %v549, %v726
        %v728 = vpop.f32.mrf.mxu0
        %v729 = vadd.f32 %v551, %v728
        %730 = vdwg.mxu0
        %s731 = scalar_lea.vmem %s236, 64
        %v732 = vld [vmem:[%s731] sm:$0xff]
        %v733 = vld [vmem:[%s731 + $0x8] sm:$0xff]
        %v734 = vld [vmem:[%s731 + $0x10] sm:$0xff]
        %v735 = vld [vmem:[%s731 + $0x18] sm:$0xff]
        %s736 = scalar_lea.vmem %s1, 1024
        %v737 = vld [vmem:[%s736] sm:$0xff]
        %v738 = vld [vmem:[%s736 + $0x8] sm:$0xff]
        %v739 = vld [vmem:[%s736 + $0x10] sm:$0xff]
        %v740 = vld [vmem:[%s736 + $0x18] sm:$0xff]
        %v741 = vld [vmem:[%s736 + $0x20] sm:$0xff]
        %v742 = vld [vmem:[%s736 + $0x28] sm:$0xff]
        %v743 = vld [vmem:[%s736 + $0x30] sm:$0xff]
        %v744 = vld [vmem:[%s736 + $0x38] sm:$0xff]
        %v745 = vld [vmem:[%s736 + $0x40] sm:$0xff]
        %v746 = vld [vmem:[%s736 + $0x48] sm:$0xff]
        %v747 = vld [vmem:[%s736 + $0x50] sm:$0xff]
        %v748 = vld [vmem:[%s736 + $0x58] sm:$0xff]
        %v749 = vld [vmem:[%s736 + $0x60] sm:$0xff]
        %v750 = vld [vmem:[%s736 + $0x68] sm:$0xff]
        %v751 = vld [vmem:[%s736 + $0x70] sm:$0xff]
        %v752 = vld [vmem:[%s736 + $0x78] sm:$0xff]
        %v753 = vld [vmem:[%s736 + $0x80] sm:$0xff]
        %v754 = vld [vmem:[%s736 + $0x88] sm:$0xff]
        %v755 = vld [vmem:[%s736 + $0x90] sm:$0xff]
        %v756 = vld [vmem:[%s736 + $0x98] sm:$0xff]
        %v757 = vld [vmem:[%s736 + $0xa0] sm:$0xff]
        %v758 = vld [vmem:[%s736 + $0xa8] sm:$0xff]
        %v759 = vld [vmem:[%s736 + $0xb0] sm:$0xff]
        %v760 = vld [vmem:[%s736 + $0xb8] sm:$0xff]
        %v761 = vld [vmem:[%s736 + $0xc0] sm:$0xff]
        %v762 = vld [vmem:[%s736 + $0xc8] sm:$0xff]
        %v763 = vld [vmem:[%s736 + $0xd0] sm:$0xff]
        %v764 = vld [vmem:[%s736 + $0xd8] sm:$0xff]
        %v765 = vld [vmem:[%s736 + $0xe0] sm:$0xff]
        %v766 = vld [vmem:[%s736 + $0xe8] sm:$0xff]
        %v767 = vld [vmem:[%s736 + $0xf0] sm:$0xff]
        %v768 = vld [vmem:[%s736 + $0xf8] sm:$0xff]
        %v769 = vld [vmem:[%s736 + $0x100] sm:$0xff]
        %v770 = vld [vmem:[%s736 + $0x108] sm:$0xff]
        %v771 = vld [vmem:[%s736 + $0x110] sm:$0xff]
        %v772 = vld [vmem:[%s736 + $0x118] sm:$0xff]
        %v773 = vld [vmem:[%s736 + $0x120] sm:$0xff]
        %v774 = vld [vmem:[%s736 + $0x128] sm:$0xff]
        %v775 = vld [vmem:[%s736 + $0x130] sm:$0xff]
        %v776 = vld [vmem:[%s736 + $0x138] sm:$0xff]
        %v777 = vld [vmem:[%s736 + $0x140] sm:$0xff]
        %v778 = vld [vmem:[%s736 + $0x148] sm:$0xff]
        %v779 = vld [vmem:[%s736 + $0x150] sm:$0xff]
        %v780 = vld [vmem:[%s736 + $0x158] sm:$0xff]
        %v781 = vld [vmem:[%s736 + $0x160] sm:$0xff]
        %v782 = vld [vmem:[%s736 + $0x168] sm:$0xff]
        %v783 = vld [vmem:[%s736 + $0x170] sm:$0xff]
        %v784 = vld [vmem:[%s736 + $0x178] sm:$0xff]
        %v785 = vld [vmem:[%s736 + $0x180] sm:$0xff]
        %v786 = vld [vmem:[%s736 + $0x188] sm:$0xff]
        %v787 = vld [vmem:[%s736 + $0x190] sm:$0xff]
        %v788 = vld [vmem:[%s736 + $0x198] sm:$0xff]
        %v789 = vld [vmem:[%s736 + $0x1a0] sm:$0xff]
        %v790 = vld [vmem:[%s736 + $0x1a8] sm:$0xff]
        %v791 = vld [vmem:[%s736 + $0x1b0] sm:$0xff]
        %v792 = vld [vmem:[%s736 + $0x1b8] sm:$0xff]
        %v793 = vld [vmem:[%s736 + $0x1c0] sm:$0xff]
        %v794 = vld [vmem:[%s736 + $0x1c8] sm:$0xff]
        %v795 = vld [vmem:[%s736 + $0x1d0] sm:$0xff]
        %v796 = vld [vmem:[%s736 + $0x1d8] sm:$0xff]
        %v797 = vld [vmem:[%s736 + $0x1e0] sm:$0xff]
        %v798 = vld [vmem:[%s736 + $0x1e8] sm:$0xff]
        %v799 = vld [vmem:[%s736 + $0x1f0] sm:$0xff]
        %v800 = vld [vmem:[%s736 + $0x1f8] sm:$0xff]
        %801 = vmatprep.subr.mxu0 %v798
        %802 = vmatpush1.msra.mxu0 %v797
        %803 = vmatprep.subr.mxu0 %v794
        %804 = vmatpush1.msra.mxu0 %v793
        %805 = vmatprep.subr.mxu0 %v790
        %806 = vmatpush1.msra.mxu0 %v789
        %807 = vmatprep.subr.mxu0 %v786
        %808 = vmatpush1.msra.mxu0 %v785
        %809 = vmatprep.subr.mxu0 %v782
        %810 = vmatpush1.msra.mxu0 %v781
        %811 = vmatprep.subr.mxu0 %v778
        %812 = vmatpush1.msra.mxu0 %v777
        %813 = vmatprep.subr.mxu0 %v774
        %814 = vmatpush1.msra.mxu0 %v773
        %815 = vmatprep.subr.mxu0 %v770
        %816 = vmatpush1.msra.mxu0 %v769
        %817 = vmatprep.subr.mxu0 %v766
        %818 = vmatpush1.msra.mxu0 %v765
        %819 = vmatprep.subr.mxu0 %v762
        %820 = vmatpush1.msra.mxu0 %v761
        %821 = vmatprep.subr.mxu0 %v758
        %822 = vmatpush1.msra.mxu0 %v757
        %823 = vmatprep.subr.mxu0 %v754
        %824 = vmatpush1.msra.mxu0 %v753
        %825 = vmatprep.subr.mxu0 %v750
        %826 = vmatpush1.msra.mxu0 %v749
        %827 = vmatprep.subr.mxu0 %v746
        %828 = vmatpush1.msra.mxu0 %v745
        %829 = vmatprep.subr.mxu0 %v742
        %830 = vmatpush1.msra.mxu0 %v741
        %831 = vmatprep.subr.mxu0 %v738
        %832 = vmatpush1.msra.mxu0 %v737
        %833 = vmatprep.subr.mxu0 0.0
        %834 = vmatpush2.msra.mxu0 0.0
        %835 = vmatprep.subr.mxu0 0.0
        %836 = vmatpush2.msra.mxu0 0.0
        %837 = vmatprep.subr.mxu0 0.0
        %838 = vmatpush2.msra.mxu0 0.0
        %839 = vmatprep.subr.mxu0 0.0
        %840 = vmatpush2.msra.mxu0 0.0
        %841 = vmatprep.subr.mxu0 0.0
        %842 = vmatpush2.msra.mxu0 0.0
        %843 = vmatprep.subr.mxu0 0.0
        %844 = vmatpush2.msra.mxu0 0.0
        %845 = vmatprep.subr.mxu0 0.0
        %846 = vmatpush2.msra.mxu0 0.0
        %847 = vmatprep.subr.mxu0 0.0
        %848 = vmatpush2.msra.mxu0 0.0
        %849 = vmatprep.subr.mxu0 0.0
        %850 = vmatpush2.msra.mxu0 0.0
        %851 = vmatprep.subr.mxu0 0.0
        %852 = vmatpush2.msra.mxu0 0.0
        %853 = vmatprep.subr.mxu0 0.0
        %854 = vmatpush2.msra.mxu0 0.0
        %855 = vmatprep.subr.mxu0 0.0
        %856 = vmatpush2.msra.mxu0 0.0
        %857 = vmatprep.subr.mxu0 0.0
        %858 = vmatpush2.msra.mxu0 0.0
        %859 = vmatprep.subr.mxu0 0.0
        %860 = vmatpush2.msra.mxu0 0.0
        %861 = vmatprep.subr.mxu0 0.0
        %862 = vmatpush2.msra.mxu0 0.0
        %863 = vmatprep.subr.mxu0 0.0
        %864 = vmatpush2.msra.mxu0 0.0
        %865 = vmatprep.mubr.f32.mxu0 0.0
        %866 = vmatmul.mubr.f32.gmra.mxu0 %v732
        %v867 = vpop.f32.mrf.mxu0
        %v868 = vadd.f32 0.0, %v867
        %v869 = vpop.f32.mrf.mxu0
        %v870 = vadd.f32 0.0, %v869
        %871 = vmatprep.mubr.f32.mxu0 0.0
        %872 = vmatmul.mubr.f32.gmra.mxu0 %v733
        %v873 = vpop.f32.mrf.mxu0
        %v874 = vadd.f32 0.0, %v873
        %v875 = vpop.f32.mrf.mxu0
        %v876 = vadd.f32 0.0, %v875
        %877 = vmatprep.mubr.f32.mxu0 0.0
        %878 = vmatmul.mubr.f32.gmra.mxu0 %v734
        %v879 = vpop.f32.mrf.mxu0
        %v880 = vadd.f32 0.0, %v879
        %v881 = vpop.f32.mrf.mxu0
        %v882 = vadd.f32 0.0, %v881
        %883 = vmatprep.mubr.f32.mxu0 0.0
        %884 = vmatmul.mubr.f32.gmra.mxu0 %v735
        %v885 = vpop.f32.mrf.mxu0
        %v886 = vadd.f32 0.0, %v885
        %v887 = vpop.f32.mrf.mxu0
        %v888 = vadd.f32 0.0, %v887
        %889 = vdwg.mxu0
        %890 = vmatprep.subr.mxu0 %v800
        %891 = vmatpush1.msra.mxu0 %v799
        %892 = vmatprep.subr.mxu0 %v796
        %893 = vmatpush1.msra.mxu0 %v795
        %894 = vmatprep.subr.mxu0 %v792
        %895 = vmatpush1.msra.mxu0 %v791
        %896 = vmatprep.subr.mxu0 %v788
        %897 = vmatpush1.msra.mxu0 %v787
        %898 = vmatprep.subr.mxu0 %v784
        %899 = vmatpush1.msra.mxu0 %v783
        %900 = vmatprep.subr.mxu0 %v780
        %901 = vmatpush1.msra.mxu0 %v779
        %902 = vmatprep.subr.mxu0 %v776
        %903 = vmatpush1.msra.mxu0 %v775
        %904 = vmatprep.subr.mxu0 %v772
        %905 = vmatpush1.msra.mxu0 %v771
        %906 = vmatprep.subr.mxu0 %v768
        %907 = vmatpush1.msra.mxu0 %v767
        %908 = vmatprep.subr.mxu0 %v764
        %909 = vmatpush1.msra.mxu0 %v763
        %910 = vmatprep.subr.mxu0 %v760
        %911 = vmatpush1.msra.mxu0 %v759
        %912 = vmatprep.subr.mxu0 %v756
        %913 = vmatpush1.msra.mxu0 %v755
        %914 = vmatprep.subr.mxu0 %v752
        %915 = vmatpush1.msra.mxu0 %v751
        %916 = vmatprep.subr.mxu0 %v748
        %917 = vmatpush1.msra.mxu0 %v747
        %918 = vmatprep.subr.mxu0 %v744
        %919 = vmatpush1.msra.mxu0 %v743
        %920 = vmatprep.subr.mxu0 %v740
        %921 = vmatpush1.msra.mxu0 %v739
        %922 = vmatprep.subr.mxu0 0.0
        %923 = vmatpush2.msra.mxu0 0.0
        %924 = vmatprep.subr.mxu0 0.0
        %925 = vmatpush2.msra.mxu0 0.0
        %926 = vmatprep.subr.mxu0 0.0
        %927 = vmatpush2.msra.mxu0 0.0
        %928 = vmatprep.subr.mxu0 0.0
        %929 = vmatpush2.msra.mxu0 0.0
        %930 = vmatprep.subr.mxu0 0.0
        %931 = vmatpush2.msra.mxu0 0.0
        %932 = vmatprep.subr.mxu0 0.0
        %933 = vmatpush2.msra.mxu0 0.0
        %934 = vmatprep.subr.mxu0 0.0
        %935 = vmatpush2.msra.mxu0 0.0
        %936 = vmatprep.subr.mxu0 0.0
        %937 = vmatpush2.msra.mxu0 0.0
        %938 = vmatprep.subr.mxu0 0.0
        %939 = vmatpush2.msra.mxu0 0.0
        %940 = vmatprep.subr.mxu0 0.0
        %941 = vmatpush2.msra.mxu0 0.0
        %942 = vmatprep.subr.mxu0 0.0
        %943 = vmatpush2.msra.mxu0 0.0
        %944 = vmatprep.subr.mxu0 0.0
        %945 = vmatpush2.msra.mxu0 0.0
        %946 = vmatprep.subr.mxu0 0.0
        %947 = vmatpush2.msra.mxu0 0.0
        %948 = vmatprep.subr.mxu0 0.0
        %949 = vmatpush2.msra.mxu0 0.0
        %950 = vmatprep.subr.mxu0 0.0
        %951 = vmatpush2.msra.mxu0 0.0
        %952 = vmatprep.subr.mxu0 0.0
        %953 = vmatpush2.msra.mxu0 0.0
        %954 = vmatprep.mubr.f32.mxu0 0.0
        %955 = vmatmul.mubr.f32.gmra.mxu0 %v732
        %v956 = vpop.f32.mrf.mxu0
        %v957 = vadd.f32 0.0, %v956
        %v958 = vpop.f32.mrf.mxu0
        %v959 = vadd.f32 0.0, %v958
        %960 = vmatprep.mubr.f32.mxu0 0.0
        %961 = vmatmul.mubr.f32.gmra.mxu0 %v733
        %v962 = vpop.f32.mrf.mxu0
        %v963 = vadd.f32 0.0, %v962
        %v964 = vpop.f32.mrf.mxu0
        %v965 = vadd.f32 0.0, %v964
        %966 = vmatprep.mubr.f32.mxu0 0.0
        %967 = vmatmul.mubr.f32.gmra.mxu0 %v734
        %v968 = vpop.f32.mrf.mxu0
        %v969 = vadd.f32 0.0, %v968
        %v970 = vpop.f32.mrf.mxu0
        %v971 = vadd.f32 0.0, %v970
        %972 = vmatprep.mubr.f32.mxu0 0.0
        %973 = vmatmul.mubr.f32.gmra.mxu0 %v735
        %v974 = vpop.f32.mrf.mxu0
        %v975 = vadd.f32 0.0, %v974
        %v976 = vpop.f32.mrf.mxu0
        %v977 = vadd.f32 0.0, %v976
        %978 = vdwg.mxu0
        %v979 = vadd.f32 %v620, %v868
        %v980 = vadd.f32 %v622, %v870
        %v981 = vadd.f32 %v709, %v957
        %v982 = vadd.f32 %v711, %v959
        %v983 = vadd.f32 %v626, %v874
        %v984 = vadd.f32 %v628, %v876
        %v985 = vadd.f32 %v715, %v963
        %v986 = vadd.f32 %v717, %v965
        %v987 = vadd.f32 %v632, %v880
        %v988 = vadd.f32 %v634, %v882
        %v989 = vadd.f32 %v721, %v969
        %v990 = vadd.f32 %v723, %v971
        %v991 = vadd.f32 %v638, %v886
        %v992 = vadd.f32 %v640, %v888
        %v993 = vadd.f32 %v727, %v975
        %v994 = vadd.f32 %v729, %v977
        %s995 = scalar_lea.vmem %s236, 96
        %v996 = vld [vmem:[%s995] sm:$0xff]
        %v997 = vld [vmem:[%s995 + $0x8] sm:$0xff]
        %v998 = vld [vmem:[%s995 + $0x10] sm:$0xff]
        %v999 = vld [vmem:[%s995 + $0x18] sm:$0xff]
        %s1000 = scalar_lea.vmem %s1, 1536
        %v1001 = vld [vmem:[%s1000] sm:$0xff]
        %v1002 = vld [vmem:[%s1000 + $0x8] sm:$0xff]
        %v1003 = vld [vmem:[%s1000 + $0x10] sm:$0xff]
        %v1004 = vld [vmem:[%s1000 + $0x18] sm:$0xff]
        %v1005 = vld [vmem:[%s1000 + $0x20] sm:$0xff]
        %v1006 = vld [vmem:[%s1000 + $0x28] sm:$0xff]
        %v1007 = vld [vmem:[%s1000 + $0x30] sm:$0xff]
        %v1008 = vld [vmem:[%s1000 + $0x38] sm:$0xff]
        %v1009 = vld [vmem:[%s1000 + $0x40] sm:$0xff]
        %v1010 = vld [vmem:[%s1000 + $0x48] sm:$0xff]
        %v1011 = vld [vmem:[%s1000 + $0x50] sm:$0xff]
        %v1012 = vld [vmem:[%s1000 + $0x58] sm:$0xff]
        %v1013 = vld [vmem:[%s1000 + $0x60] sm:$0xff]
        %v1014 = vld [vmem:[%s1000 + $0x68] sm:$0xff]
        %v1015 = vld [vmem:[%s1000 + $0x70] sm:$0xff]
        %v1016 = vld [vmem:[%s1000 + $0x78] sm:$0xff]
        %v1017 = vld [vmem:[%s1000 + $0x80] sm:$0xff]
        %v1018 = vld [vmem:[%s1000 + $0x88] sm:$0xff]
        %v1019 = vld [vmem:[%s1000 + $0x90] sm:$0xff]
        %v1020 = vld [vmem:[%s1000 + $0x98] sm:$0xff]
        %v1021 = vld [vmem:[%s1000 + $0xa0] sm:$0xff]
        %v1022 = vld [vmem:[%s1000 + $0xa8] sm:$0xff]
        %v1023 = vld [vmem:[%s1000 + $0xb0] sm:$0xff]
        %v1024 = vld [vmem:[%s1000 + $0xb8] sm:$0xff]
        %v1025 = vld [vmem:[%s1000 + $0xc0] sm:$0xff]
        %v1026 = vld [vmem:[%s1000 + $0xc8] sm:$0xff]
        %v1027 = vld [vmem:[%s1000 + $0xd0] sm:$0xff]
        %v1028 = vld [vmem:[%s1000 + $0xd8] sm:$0xff]
        %v1029 = vld [vmem:[%s1000 + $0xe0] sm:$0xff]
        %v1030 = vld [vmem:[%s1000 + $0xe8] sm:$0xff]
        %v1031 = vld [vmem:[%s1000 + $0xf0] sm:$0xff]
        %v1032 = vld [vmem:[%s1000 + $0xf8] sm:$0xff]
        %v1033 = vld [vmem:[%s1000 + $0x100] sm:$0xff]
        %v1034 = vld [vmem:[%s1000 + $0x108] sm:$0xff]
        %v1035 = vld [vmem:[%s1000 + $0x110] sm:$0xff]
        %v1036 = vld [vmem:[%s1000 + $0x118] sm:$0xff]
        %v1037 = vld [vmem:[%s1000 + $0x120] sm:$0xff]
        %v1038 = vld [vmem:[%s1000 + $0x128] sm:$0xff]
        %v1039 = vld [vmem:[%s1000 + $0x130] sm:$0xff]
        %v1040 = vld [vmem:[%s1000 + $0x138] sm:$0xff]
        %v1041 = vld [vmem:[%s1000 + $0x140] sm:$0xff]
        %v1042 = vld [vmem:[%s1000 + $0x148] sm:$0xff]
        %v1043 = vld [vmem:[%s1000 + $0x150] sm:$0xff]
        %v1044 = vld [vmem:[%s1000 + $0x158] sm:$0xff]
        %v1045 = vld [vmem:[%s1000 + $0x160] sm:$0xff]
        %v1046 = vld [vmem:[%s1000 + $0x168] sm:$0xff]
        %v1047 = vld [vmem:[%s1000 + $0x170] sm:$0xff]
        %v1048 = vld [vmem:[%s1000 + $0x178] sm:$0xff]
        %v1049 = vld [vmem:[%s1000 + $0x180] sm:$0xff]
        %v1050 = vld [vmem:[%s1000 + $0x188] sm:$0xff]
        %v1051 = vld [vmem:[%s1000 + $0x190] sm:$0xff]
        %v1052 = vld [vmem:[%s1000 + $0x198] sm:$0xff]
        %v1053 = vld [vmem:[%s1000 + $0x1a0] sm:$0xff]
        %v1054 = vld [vmem:[%s1000 + $0x1a8] sm:$0xff]
        %v1055 = vld [vmem:[%s1000 + $0x1b0] sm:$0xff]
        %v1056 = vld [vmem:[%s1000 + $0x1b8] sm:$0xff]
        %v1057 = vld [vmem:[%s1000 + $0x1c0] sm:$0xff]
        %v1058 = vld [vmem:[%s1000 + $0x1c8] sm:$0xff]
        %v1059 = vld [vmem:[%s1000 + $0x1d0] sm:$0xff]
        %v1060 = vld [vmem:[%s1000 + $0x1d8] sm:$0xff]
        %v1061 = vld [vmem:[%s1000 + $0x1e0] sm:$0xff]
        %v1062 = vld [vmem:[%s1000 + $0x1e8] sm:$0xff]
        %v1063 = vld [vmem:[%s1000 + $0x1f0] sm:$0xff]
        %v1064 = vld [vmem:[%s1000 + $0x1f8] sm:$0xff]
        %1065 = vmatprep.subr.mxu0 %v1062
        %1066 = vmatpush1.msra.mxu0 %v1061
        %1067 = vmatprep.subr.mxu0 %v1058
        %1068 = vmatpush1.msra.mxu0 %v1057
        %1069 = vmatprep.subr.mxu0 %v1054
        %1070 = vmatpush1.msra.mxu0 %v1053
        %1071 = vmatprep.subr.mxu0 %v1050
        %1072 = vmatpush1.msra.mxu0 %v1049
        %1073 = vmatprep.subr.mxu0 %v1046
        %1074 = vmatpush1.msra.mxu0 %v1045
        %1075 = vmatprep.subr.mxu0 %v1042
        %1076 = vmatpush1.msra.mxu0 %v1041
        %1077 = vmatprep.subr.mxu0 %v1038
        %1078 = vmatpush1.msra.mxu0 %v1037
        %1079 = vmatprep.subr.mxu0 %v1034
        %1080 = vmatpush1.msra.mxu0 %v1033
        %1081 = vmatprep.subr.mxu0 %v1030
        %1082 = vmatpush1.msra.mxu0 %v1029
        %1083 = vmatprep.subr.mxu0 %v1026
        %1084 = vmatpush1.msra.mxu0 %v1025
        %1085 = vmatprep.subr.mxu0 %v1022
        %1086 = vmatpush1.msra.mxu0 %v1021
        %1087 = vmatprep.subr.mxu0 %v1018
        %1088 = vmatpush1.msra.mxu0 %v1017
        %1089 = vmatprep.subr.mxu0 %v1014
        %1090 = vmatpush1.msra.mxu0 %v1013
        %1091 = vmatprep.subr.mxu0 %v1010
        %1092 = vmatpush1.msra.mxu0 %v1009
        %1093 = vmatprep.subr.mxu0 %v1006
        %1094 = vmatpush1.msra.mxu0 %v1005
        %1095 = vmatprep.subr.mxu0 %v1002
        %1096 = vmatpush1.msra.mxu0 %v1001
        %1097 = vmatprep.subr.mxu0 0.0
        %1098 = vmatpush2.msra.mxu0 0.0
        %1099 = vmatprep.subr.mxu0 0.0
        %1100 = vmatpush2.msra.mxu0 0.0
        %1101 = vmatprep.subr.mxu0 0.0
        %1102 = vmatpush2.msra.mxu0 0.0
        %1103 = vmatprep.subr.mxu0 0.0
        %1104 = vmatpush2.msra.mxu0 0.0
        %1105 = vmatprep.subr.mxu0 0.0
        %1106 = vmatpush2.msra.mxu0 0.0
        %1107 = vmatprep.subr.mxu0 0.0
        %1108 = vmatpush2.msra.mxu0 0.0
        %1109 = vmatprep.subr.mxu0 0.0
        %1110 = vmatpush2.msra.mxu0 0.0
        %1111 = vmatprep.subr.mxu0 0.0
        %1112 = vmatpush2.msra.mxu0 0.0
        %1113 = vmatprep.subr.mxu0 0.0
        %1114 = vmatpush2.msra.mxu0 0.0
        %1115 = vmatprep.subr.mxu0 0.0
        %1116 = vmatpush2.msra.mxu0 0.0
        %1117 = vmatprep.subr.mxu0 0.0
        %1118 = vmatpush2.msra.mxu0 0.0
        %1119 = vmatprep.subr.mxu0 0.0
        %1120 = vmatpush2.msra.mxu0 0.0
        %1121 = vmatprep.subr.mxu0 0.0
        %1122 = vmatpush2.msra.mxu0 0.0
        %1123 = vmatprep.subr.mxu0 0.0
        %1124 = vmatpush2.msra.mxu0 0.0
        %1125 = vmatprep.subr.mxu0 0.0
        %1126 = vmatpush2.msra.mxu0 0.0
        %1127 = vmatprep.subr.mxu0 0.0
        %1128 = vmatpush2.msra.mxu0 0.0
        %1129 = vmatprep.mubr.f32.mxu0 0.0
        %1130 = vmatmul.mubr.f32.gmra.mxu0 %v996
        %v1131 = vpop.f32.mrf.mxu0
        %v1132 = vadd.f32 0.0, %v1131
        %v1133 = vpop.f32.mrf.mxu0
        %v1134 = vadd.f32 0.0, %v1133
        %1135 = vmatprep.mubr.f32.mxu0 0.0
        %1136 = vmatmul.mubr.f32.gmra.mxu0 %v997
        %v1137 = vpop.f32.mrf.mxu0
        %v1138 = vadd.f32 0.0, %v1137
        %v1139 = vpop.f32.mrf.mxu0
        %v1140 = vadd.f32 0.0, %v1139
        %1141 = vmatprep.mubr.f32.mxu0 0.0
        %1142 = vmatmul.mubr.f32.gmra.mxu0 %v998
        %v1143 = vpop.f32.mrf.mxu0
        %v1144 = vadd.f32 0.0, %v1143
        %v1145 = vpop.f32.mrf.mxu0
        %v1146 = vadd.f32 0.0, %v1145
        %1147 = vmatprep.mubr.f32.mxu0 0.0
        %1148 = vmatmul.mubr.f32.gmra.mxu0 %v999
        %v1149 = vpop.f32.mrf.mxu0
        %v1150 = vadd.f32 0.0, %v1149
        %v1151 = vpop.f32.mrf.mxu0
        %v1152 = vadd.f32 0.0, %v1151
        %1153 = vdwg.mxu0
        %1154 = vmatprep.subr.mxu0 %v1064
        %1155 = vmatpush1.msra.mxu0 %v1063
        %1156 = vmatprep.subr.mxu0 %v1060
        %1157 = vmatpush1.msra.mxu0 %v1059
        %1158 = vmatprep.subr.mxu0 %v1056
        %1159 = vmatpush1.msra.mxu0 %v1055
        %1160 = vmatprep.subr.mxu0 %v1052
        %1161 = vmatpush1.msra.mxu0 %v1051
        %1162 = vmatprep.subr.mxu0 %v1048
        %1163 = vmatpush1.msra.mxu0 %v1047
        %1164 = vmatprep.subr.mxu0 %v1044
        %1165 = vmatpush1.msra.mxu0 %v1043
        %1166 = vmatprep.subr.mxu0 %v1040
        %1167 = vmatpush1.msra.mxu0 %v1039
        %1168 = vmatprep.subr.mxu0 %v1036
        %1169 = vmatpush1.msra.mxu0 %v1035
        %1170 = vmatprep.subr.mxu0 %v1032
        %1171 = vmatpush1.msra.mxu0 %v1031
        %1172 = vmatprep.subr.mxu0 %v1028
        %1173 = vmatpush1.msra.mxu0 %v1027
        %1174 = vmatprep.subr.mxu0 %v1024
        %1175 = vmatpush1.msra.mxu0 %v1023
        %1176 = vmatprep.subr.mxu0 %v1020
        %1177 = vmatpush1.msra.mxu0 %v1019
        %1178 = vmatprep.subr.mxu0 %v1016
        %1179 = vmatpush1.msra.mxu0 %v1015
        %1180 = vmatprep.subr.mxu0 %v1012
        %1181 = vmatpush1.msra.mxu0 %v1011
        %1182 = vmatprep.subr.mxu0 %v1008
        %1183 = vmatpush1.msra.mxu0 %v1007
        %1184 = vmatprep.subr.mxu0 %v1004
        %1185 = vmatpush1.msra.mxu0 %v1003
        %1186 = vmatprep.subr.mxu0 0.0
        %1187 = vmatpush2.msra.mxu0 0.0
        %1188 = vmatprep.subr.mxu0 0.0
        %1189 = vmatpush2.msra.mxu0 0.0
        %1190 = vmatprep.subr.mxu0 0.0
        %1191 = vmatpush2.msra.mxu0 0.0
        %1192 = vmatprep.subr.mxu0 0.0
        %1193 = vmatpush2.msra.mxu0 0.0
        %1194 = vmatprep.subr.mxu0 0.0
        %1195 = vmatpush2.msra.mxu0 0.0
        %1196 = vmatprep.subr.mxu0 0.0
        %1197 = vmatpush2.msra.mxu0 0.0
        %1198 = vmatprep.subr.mxu0 0.0
        %1199 = vmatpush2.msra.mxu0 0.0
        %1200 = vmatprep.subr.mxu0 0.0
        %1201 = vmatpush2.msra.mxu0 0.0
        %1202 = vmatprep.subr.mxu0 0.0
        %1203 = vmatpush2.msra.mxu0 0.0
        %1204 = vmatprep.subr.mxu0 0.0
        %1205 = vmatpush2.msra.mxu0 0.0
        %1206 = vmatprep.subr.mxu0 0.0
        %1207 = vmatpush2.msra.mxu0 0.0
        %1208 = vmatprep.subr.mxu0 0.0
        %1209 = vmatpush2.msra.mxu0 0.0
        %1210 = vmatprep.subr.mxu0 0.0
        %1211 = vmatpush2.msra.mxu0 0.0
        %1212 = vmatprep.subr.mxu0 0.0
        %1213 = vmatpush2.msra.mxu0 0.0
        %1214 = vmatprep.subr.mxu0 0.0
        %1215 = vmatpush2.msra.mxu0 0.0
        %1216 = vmatprep.subr.mxu0 0.0
        %1217 = vmatpush2.msra.mxu0 0.0
        %1218 = vmatprep.mubr.f32.mxu0 0.0
        %1219 = vmatmul.mubr.f32.gmra.mxu0 %v996
        %v1220 = vpop.f32.mrf.mxu0
        %v1221 = vadd.f32 0.0, %v1220
        %v1222 = vpop.f32.mrf.mxu0
        %v1223 = vadd.f32 0.0, %v1222
        %1224 = vmatprep.mubr.f32.mxu0 0.0
        %1225 = vmatmul.mubr.f32.gmra.mxu0 %v997
        %v1226 = vpop.f32.mrf.mxu0
        %v1227 = vadd.f32 0.0, %v1226
        %v1228 = vpop.f32.mrf.mxu0
        %v1229 = vadd.f32 0.0, %v1228
        %1230 = vmatprep.mubr.f32.mxu0 0.0
        %1231 = vmatmul.mubr.f32.gmra.mxu0 %v998
        %v1232 = vpop.f32.mrf.mxu0
        %v1233 = vadd.f32 0.0, %v1232
        %v1234 = vpop.f32.mrf.mxu0
        %v1235 = vadd.f32 0.0, %v1234
        %1236 = vmatprep.mubr.f32.mxu0 0.0
        %1237 = vmatmul.mubr.f32.gmra.mxu0 %v999
        %v1238 = vpop.f32.mrf.mxu0
        %v1239 = vadd.f32 0.0, %v1238
        %v1240 = vpop.f32.mrf.mxu0
        %v1241 = vadd.f32 0.0, %v1240
        %1242 = vdwg.mxu0
        %v1243 = vadd.f32 %v979, %v1132
        %v1244 = vadd.f32 %v980, %v1134
        %v1245 = vadd.f32 %v981, %v1221
        %v1246 = vadd.f32 %v982, %v1223
        %v1247 = vadd.f32 %v983, %v1138
        %v1248 = vadd.f32 %v984, %v1140
        %v1249 = vadd.f32 %v985, %v1227
        %v1250 = vadd.f32 %v986, %v1229
        %v1251 = vadd.f32 %v987, %v1144
        %v1252 = vadd.f32 %v988, %v1146
        %v1253 = vadd.f32 %v989, %v1233
        %v1254 = vadd.f32 %v990, %v1235
        %v1255 = vadd.f32 %v991, %v1150
        %v1256 = vadd.f32 %v992, %v1152
        %v1257 = vadd.f32 %v993, %v1239
        %v1258 = vadd.f32 %v994, %v1241
        %s1259 = scalar_lea.vmem %s236, 128
        %v1260 = vld [vmem:[%s1259] sm:$0xff]
        %v1261 = vld [vmem:[%s1259 + $0x8] sm:$0xff]
        %v1262 = vld [vmem:[%s1259 + $0x10] sm:$0xff]
        %v1263 = vld [vmem:[%s1259 + $0x18] sm:$0xff]
        %s1264 = scalar_lea.vmem %s1, 2048
        %v1265 = vld [vmem:[%s1264] sm:$0xff]
        %v1266 = vld [vmem:[%s1264 + $0x8] sm:$0xff]
        %v1267 = vld [vmem:[%s1264 + $0x10] sm:$0xff]
        %v1268 = vld [vmem:[%s1264 + $0x18] sm:$0xff]
        %v1269 = vld [vmem:[%s1264 + $0x20] sm:$0xff]
        %v1270 = vld [vmem:[%s1264 + $0x28] sm:$0xff]
        %v1271 = vld [vmem:[%s1264 + $0x30] sm:$0xff]
        %v1272 = vld [vmem:[%s1264 + $0x38] sm:$0xff]
        %v1273 = vld [vmem:[%s1264 + $0x40] sm:$0xff]
        %v1274 = vld [vmem:[%s1264 + $0x48] sm:$0xff]
        %v1275 = vld [vmem:[%s1264 + $0x50] sm:$0xff]
        %v1276 = vld [vmem:[%s1264 + $0x58] sm:$0xff]
        %v1277 = vld [vmem:[%s1264 + $0x60] sm:$0xff]
        %v1278 = vld [vmem:[%s1264 + $0x68] sm:$0xff]
        %v1279 = vld [vmem:[%s1264 + $0x70] sm:$0xff]
        %v1280 = vld [vmem:[%s1264 + $0x78] sm:$0xff]
        %v1281 = vld [vmem:[%s1264 + $0x80] sm:$0xff]
        %v1282 = vld [vmem:[%s1264 + $0x88] sm:$0xff]
        %v1283 = vld [vmem:[%s1264 + $0x90] sm:$0xff]
        %v1284 = vld [vmem:[%s1264 + $0x98] sm:$0xff]
        %v1285 = vld [vmem:[%s1264 + $0xa0] sm:$0xff]
        %v1286 = vld [vmem:[%s1264 + $0xa8] sm:$0xff]
        %v1287 = vld [vmem:[%s1264 + $0xb0] sm:$0xff]
        %v1288 = vld [vmem:[%s1264 + $0xb8] sm:$0xff]
        %v1289 = vld [vmem:[%s1264 + $0xc0] sm:$0xff]
        %v1290 = vld [vmem:[%s1264 + $0xc8] sm:$0xff]
        %v1291 = vld [vmem:[%s1264 + $0xd0] sm:$0xff]
        %v1292 = vld [vmem:[%s1264 + $0xd8] sm:$0xff]
        %v1293 = vld [vmem:[%s1264 + $0xe0] sm:$0xff]
        %v1294 = vld [vmem:[%s1264 + $0xe8] sm:$0xff]
        %v1295 = vld [vmem:[%s1264 + $0xf0] sm:$0xff]
        %v1296 = vld [vmem:[%s1264 + $0xf8] sm:$0xff]
        %v1297 = vld [vmem:[%s1264 + $0x100] sm:$0xff]
        %v1298 = vld [vmem:[%s1264 + $0x108] sm:$0xff]
        %v1299 = vld [vmem:[%s1264 + $0x110] sm:$0xff]
        %v1300 = vld [vmem:[%s1264 + $0x118] sm:$0xff]
        %v1301 = vld [vmem:[%s1264 + $0x120] sm:$0xff]
        %v1302 = vld [vmem:[%s1264 + $0x128] sm:$0xff]
        %v1303 = vld [vmem:[%s1264 + $0x130] sm:$0xff]
        %v1304 = vld [vmem:[%s1264 + $0x138] sm:$0xff]
        %v1305 = vld [vmem:[%s1264 + $0x140] sm:$0xff]
        %v1306 = vld [vmem:[%s1264 + $0x148] sm:$0xff]
        %v1307 = vld [vmem:[%s1264 + $0x150] sm:$0xff]
        %v1308 = vld [vmem:[%s1264 + $0x158] sm:$0xff]
        %v1309 = vld [vmem:[%s1264 + $0x160] sm:$0xff]
        %v1310 = vld [vmem:[%s1264 + $0x168] sm:$0xff]
        %v1311 = vld [vmem:[%s1264 + $0x170] sm:$0xff]
        %v1312 = vld [vmem:[%s1264 + $0x178] sm:$0xff]
        %v1313 = vld [vmem:[%s1264 + $0x180] sm:$0xff]
        %v1314 = vld [vmem:[%s1264 + $0x188] sm:$0xff]
        %v1315 = vld [vmem:[%s1264 + $0x190] sm:$0xff]
        %v1316 = vld [vmem:[%s1264 + $0x198] sm:$0xff]
        %v1317 = vld [vmem:[%s1264 + $0x1a0] sm:$0xff]
        %v1318 = vld [vmem:[%s1264 + $0x1a8] sm:$0xff]
        %v1319 = vld [vmem:[%s1264 + $0x1b0] sm:$0xff]
        %v1320 = vld [vmem:[%s1264 + $0x1b8] sm:$0xff]
        %v1321 = vld [vmem:[%s1264 + $0x1c0] sm:$0xff]
        %v1322 = vld [vmem:[%s1264 + $0x1c8] sm:$0xff]
        %v1323 = vld [vmem:[%s1264 + $0x1d0] sm:$0xff]
        %v1324 = vld [vmem:[%s1264 + $0x1d8] sm:$0xff]
        %v1325 = vld [vmem:[%s1264 + $0x1e0] sm:$0xff]
        %v1326 = vld [vmem:[%s1264 + $0x1e8] sm:$0xff]
        %v1327 = vld [vmem:[%s1264 + $0x1f0] sm:$0xff]
        %v1328 = vld [vmem:[%s1264 + $0x1f8] sm:$0xff]
        %1329 = vmatprep.subr.mxu0 %v1326
        %1330 = vmatpush1.msra.mxu0 %v1325
        %1331 = vmatprep.subr.mxu0 %v1322
        %1332 = vmatpush1.msra.mxu0 %v1321
        %1333 = vmatprep.subr.mxu0 %v1318
        %1334 = vmatpush1.msra.mxu0 %v1317
        %1335 = vmatprep.subr.mxu0 %v1314
        %1336 = vmatpush1.msra.mxu0 %v1313
        %1337 = vmatprep.subr.mxu0 %v1310
        %1338 = vmatpush1.msra.mxu0 %v1309
        %1339 = vmatprep.subr.mxu0 %v1306
        %1340 = vmatpush1.msra.mxu0 %v1305
        %1341 = vmatprep.subr.mxu0 %v1302
        %1342 = vmatpush1.msra.mxu0 %v1301
        %1343 = vmatprep.subr.mxu0 %v1298
        %1344 = vmatpush1.msra.mxu0 %v1297
        %1345 = vmatprep.subr.mxu0 %v1294
        %1346 = vmatpush1.msra.mxu0 %v1293
        %1347 = vmatprep.subr.mxu0 %v1290
        %1348 = vmatpush1.msra.mxu0 %v1289
        %1349 = vmatprep.subr.mxu0 %v1286
        %1350 = vmatpush1.msra.mxu0 %v1285
        %1351 = vmatprep.subr.mxu0 %v1282
        %1352 = vmatpush1.msra.mxu0 %v1281
        %1353 = vmatprep.subr.mxu0 %v1278
        %1354 = vmatpush1.msra.mxu0 %v1277
        %1355 = vmatprep.subr.mxu0 %v1274
        %1356 = vmatpush1.msra.mxu0 %v1273
        %1357 = vmatprep.subr.mxu0 %v1270
        %1358 = vmatpush1.msra.mxu0 %v1269
        %1359 = vmatprep.subr.mxu0 %v1266
        %1360 = vmatpush1.msra.mxu0 %v1265
        %1361 = vmatprep.subr.mxu0 0.0
        %1362 = vmatpush2.msra.mxu0 0.0
        %1363 = vmatprep.subr.mxu0 0.0
        %1364 = vmatpush2.msra.mxu0 0.0
        %1365 = vmatprep.subr.mxu0 0.0
        %1366 = vmatpush2.msra.mxu0 0.0
        %1367 = vmatprep.subr.mxu0 0.0
        %1368 = vmatpush2.msra.mxu0 0.0
        %1369 = vmatprep.subr.mxu0 0.0
        %1370 = vmatpush2.msra.mxu0 0.0
        %1371 = vmatprep.subr.mxu0 0.0
        %1372 = vmatpush2.msra.mxu0 0.0
        %1373 = vmatprep.subr.mxu0 0.0
        %1374 = vmatpush2.msra.mxu0 0.0
        %1375 = vmatprep.subr.mxu0 0.0
        %1376 = vmatpush2.msra.mxu0 0.0
        %1377 = vmatprep.subr.mxu0 0.0
        %1378 = vmatpush2.msra.mxu0 0.0
        %1379 = vmatprep.subr.mxu0 0.0
        %1380 = vmatpush2.msra.mxu0 0.0
        %1381 = vmatprep.subr.mxu0 0.0
        %1382 = vmatpush2.msra.mxu0 0.0
        %1383 = vmatprep.subr.mxu0 0.0
        %1384 = vmatpush2.msra.mxu0 0.0
        %1385 = vmatprep.subr.mxu0 0.0
        %1386 = vmatpush2.msra.mxu0 0.0
        %1387 = vmatprep.subr.mxu0 0.0
        %1388 = vmatpush2.msra.mxu0 0.0
        %1389 = vmatprep.subr.mxu0 0.0
        %1390 = vmatpush2.msra.mxu0 0.0
        %1391 = vmatprep.subr.mxu0 0.0
        %1392 = vmatpush2.msra.mxu0 0.0
        %1393 = vmatprep.mubr.f32.mxu0 0.0
        %1394 = vmatmul.mubr.f32.gmra.mxu0 %v1260
        %v1395 = vpop.f32.mrf.mxu0
        %v1396 = vadd.f32 0.0, %v1395
        %v1397 = vpop.f32.mrf.mxu0
        %v1398 = vadd.f32 0.0, %v1397
        %1399 = vmatprep.mubr.f32.mxu0 0.0
        %1400 = vmatmul.mubr.f32.gmra.mxu0 %v1261
        %v1401 = vpop.f32.mrf.mxu0
        %v1402 = vadd.f32 0.0, %v1401
        %v1403 = vpop.f32.mrf.mxu0
        %v1404 = vadd.f32 0.0, %v1403
        %1405 = vmatprep.mubr.f32.mxu0 0.0
        %1406 = vmatmul.mubr.f32.gmra.mxu0 %v1262
        %v1407 = vpop.f32.mrf.mxu0
        %v1408 = vadd.f32 0.0, %v1407
        %v1409 = vpop.f32.mrf.mxu0
        %v1410 = vadd.f32 0.0, %v1409
        %1411 = vmatprep.mubr.f32.mxu0 0.0
        %1412 = vmatmul.mubr.f32.gmra.mxu0 %v1263
        %v1413 = vpop.f32.mrf.mxu0
        %v1414 = vadd.f32 0.0, %v1413
        %v1415 = vpop.f32.mrf.mxu0
        %v1416 = vadd.f32 0.0, %v1415
        %1417 = vdwg.mxu0
        %1418 = vmatprep.subr.mxu0 %v1328
        %1419 = vmatpush1.msra.mxu0 %v1327
        %1420 = vmatprep.subr.mxu0 %v1324
        %1421 = vmatpush1.msra.mxu0 %v1323
        %1422 = vmatprep.subr.mxu0 %v1320
        %1423 = vmatpush1.msra.mxu0 %v1319
        %1424 = vmatprep.subr.mxu0 %v1316
        %1425 = vmatpush1.msra.mxu0 %v1315
        %1426 = vmatprep.subr.mxu0 %v1312
        %1427 = vmatpush1.msra.mxu0 %v1311
        %1428 = vmatprep.subr.mxu0 %v1308
        %1429 = vmatpush1.msra.mxu0 %v1307
        %1430 = vmatprep.subr.mxu0 %v1304
        %1431 = vmatpush1.msra.mxu0 %v1303
        %1432 = vmatprep.subr.mxu0 %v1300
        %1433 = vmatpush1.msra.mxu0 %v1299
        %1434 = vmatprep.subr.mxu0 %v1296
        %1435 = vmatpush1.msra.mxu0 %v1295
        %1436 = vmatprep.subr.mxu0 %v1292
        %1437 = vmatpush1.msra.mxu0 %v1291
        %1438 = vmatprep.subr.mxu0 %v1288
        %1439 = vmatpush1.msra.mxu0 %v1287
        %1440 = vmatprep.subr.mxu0 %v1284
        %1441 = vmatpush1.msra.mxu0 %v1283
        %1442 = vmatprep.subr.mxu0 %v1280
        %1443 = vmatpush1.msra.mxu0 %v1279
        %1444 = vmatprep.subr.mxu0 %v1276
        %1445 = vmatpush1.msra.mxu0 %v1275
        %1446 = vmatprep.subr.mxu0 %v1272
        %1447 = vmatpush1.msra.mxu0 %v1271
        %1448 = vmatprep.subr.mxu0 %v1268
        %1449 = vmatpush1.msra.mxu0 %v1267
        %1450 = vmatprep.subr.mxu0 0.0
        %1451 = vmatpush2.msra.mxu0 0.0
        %1452 = vmatprep.subr.mxu0 0.0
        %1453 = vmatpush2.msra.mxu0 0.0
        %1454 = vmatprep.subr.mxu0 0.0
        %1455 = vmatpush2.msra.mxu0 0.0
        %1456 = vmatprep.subr.mxu0 0.0
        %1457 = vmatpush2.msra.mxu0 0.0
        %1458 = vmatprep.subr.mxu0 0.0
        %1459 = vmatpush2.msra.mxu0 0.0
        %1460 = vmatprep.subr.mxu0 0.0
        %1461 = vmatpush2.msra.mxu0 0.0
        %1462 = vmatprep.subr.mxu0 0.0
        %1463 = vmatpush2.msra.mxu0 0.0
        %1464 = vmatprep.subr.mxu0 0.0
        %1465 = vmatpush2.msra.mxu0 0.0
        %1466 = vmatprep.subr.mxu0 0.0
        %1467 = vmatpush2.msra.mxu0 0.0
        %1468 = vmatprep.subr.mxu0 0.0
        %1469 = vmatpush2.msra.mxu0 0.0
        %1470 = vmatprep.subr.mxu0 0.0
        %1471 = vmatpush2.msra.mxu0 0.0
        %1472 = vmatprep.subr.mxu0 0.0
        %1473 = vmatpush2.msra.mxu0 0.0
        %1474 = vmatprep.subr.mxu0 0.0
        %1475 = vmatpush2.msra.mxu0 0.0
        %1476 = vmatprep.subr.mxu0 0.0
        %1477 = vmatpush2.msra.mxu0 0.0
        %1478 = vmatprep.subr.mxu0 0.0
        %1479 = vmatpush2.msra.mxu0 0.0
        %1480 = vmatprep.subr.mxu0 0.0
        %1481 = vmatpush2.msra.mxu0 0.0
        %1482 = vmatprep.mubr.f32.mxu0 0.0
        %1483 = vmatmul.mubr.f32.gmra.mxu0 %v1260
        %v1484 = vpop.f32.mrf.mxu0
        %v1485 = vadd.f32 0.0, %v1484
        %v1486 = vpop.f32.mrf.mxu0
        %v1487 = vadd.f32 0.0, %v1486
        %1488 = vmatprep.mubr.f32.mxu0 0.0
        %1489 = vmatmul.mubr.f32.gmra.mxu0 %v1261
        %v1490 = vpop.f32.mrf.mxu0
        %v1491 = vadd.f32 0.0, %v1490
        %v1492 = vpop.f32.mrf.mxu0
        %v1493 = vadd.f32 0.0, %v1492
        %1494 = vmatprep.mubr.f32.mxu0 0.0
        %1495 = vmatmul.mubr.f32.gmra.mxu0 %v1262
        %v1496 = vpop.f32.mrf.mxu0
        %v1497 = vadd.f32 0.0, %v1496
        %v1498 = vpop.f32.mrf.mxu0
        %v1499 = vadd.f32 0.0, %v1498
        %1500 = vmatprep.mubr.f32.mxu0 0.0
        %1501 = vmatmul.mubr.f32.gmra.mxu0 %v1263
        %v1502 = vpop.f32.mrf.mxu0
        %v1503 = vadd.f32 0.0, %v1502
        %v1504 = vpop.f32.mrf.mxu0
        %v1505 = vadd.f32 0.0, %v1504
        %1506 = vdwg.mxu0
        %v1507 = vadd.f32 %v1243, %v1396
        %v1508 = vadd.f32 %v1244, %v1398
        %v1509 = vadd.f32 %v1245, %v1485
        %v1510 = vadd.f32 %v1246, %v1487
        %v1511 = vadd.f32 %v1247, %v1402
        %v1512 = vadd.f32 %v1248, %v1404
        %v1513 = vadd.f32 %v1249, %v1491
        %v1514 = vadd.f32 %v1250, %v1493
        %v1515 = vadd.f32 %v1251, %v1408
        %v1516 = vadd.f32 %v1252, %v1410
        %v1517 = vadd.f32 %v1253, %v1497
        %v1518 = vadd.f32 %v1254, %v1499
        %v1519 = vadd.f32 %v1255, %v1414
        %v1520 = vadd.f32 %v1256, %v1416
        %v1521 = vadd.f32 %v1257, %v1503
        %v1522 = vadd.f32 %v1258, %v1505
        %v1523 = vmax.f32 %v1507, %v1509
        %v1524 = vmax.f32 %v1508, %v1510
        %v1525 = vmax.f32 %v1511, %v1513
        %v1526 = vmax.f32 %v1512, %v1514
        %v1527 = vmax.f32 %v1515, %v1517
        %v1528 = vmax.f32 %v1516, %v1518
        %v1529 = vmax.f32 %v1519, %v1521
        %v1530 = vmax.f32 %v1520, %v1522
        %v1531 = vmax.f32 %v1523, %v1527
        %v1532 = vmax.f32 %v1524, %v1528
        %v1533 = vmax.f32 %v1525, %v1529
        %v1534 = vmax.f32 %v1526, %v1530
        %v1535 = vld [vmem:[%s2] sm:$0x3]
        %v1537 = vlaneseq
        %v1538 = vshrl.u32 %v1537, 7
        %v1539 = vsub.s32 0, %v1538
        %v1540 = vrot.slane %v1535, %v1539
        %v1541 = vlaneseq
        %v1542 = vshrl.u32 %v1541, 7
        %v1543 = vsub.s32 1, %v1542
        %v1544 = vrot.slane %v1535, %v1543
        %v1547 = vadd.f32 %v1531, %v1540
        %v1548 = vadd.f32 %v1532, %v1544
        %v1549 = vadd.f32 %v1533, %v1540
        %v1550 = vadd.f32 %v1534, %v1544
        %v1551 = vmax.f32 %v1547, 0.0
        %v1552 = vmax.f32 %v1548, 0.0
        %v1553 = vmax.f32 %v1549, 0.0
        %v1554 = vmax.f32 %v1550, 0.0
        %v1555 = vld [vmem:[#allocation2] sm:$0xff]
        %v1556 = vld [vmem:[#allocation2 + $0x8] sm:$0xff]
        %v1557 = vld [vmem:[#allocation2 + $0x10] sm:$0xff]
        %v1558 = vld [vmem:[#allocation2 + $0x18] sm:$0xff]
        %v1559 = vld [vmem:[#allocation2 + $0x20] sm:$0xff]
        %v1560 = vld [vmem:[#allocation2 + $0x28] sm:$0xff]
        %v1561 = vld [vmem:[#allocation2 + $0x30] sm:$0xff]
        %v1562 = vld [vmem:[#allocation2 + $0x38] sm:$0xff]
        %v1563 = vld [vmem:[#allocation2 + $0x40] sm:$0xff]
        %v1564 = vld [vmem:[#allocation2 + $0x48] sm:$0xff]
        %v1565 = vld [vmem:[#allocation2 + $0x50] sm:$0xff]
        %v1566 = vld [vmem:[#allocation2 + $0x58] sm:$0xff]
        %v1567 = vld [vmem:[#allocation2 + $0x60] sm:$0xff]
        %v1568 = vld [vmem:[#allocation2 + $0x68] sm:$0xff]
        %v1569 = vld [vmem:[#allocation2 + $0x70] sm:$0xff]
        %v1570 = vld [vmem:[#allocation2 + $0x78] sm:$0xff]
        %v1571 = vld [vmem:[#allocation2 + $0x80] sm:$0xff]
        %v1572 = vld [vmem:[#allocation2 + $0x88] sm:$0xff]
        %v1573 = vld [vmem:[#allocation2 + $0x90] sm:$0xff]
        %v1574 = vld [vmem:[#allocation2 + $0x98] sm:$0xff]
        %v1575 = vld [vmem:[#allocation2 + $0xa0] sm:$0xff]
        %v1576 = vld [vmem:[#allocation2 + $0xa8] sm:$0xff]
        %v1577 = vld [vmem:[#allocation2 + $0xb0] sm:$0xff]
        %v1578 = vld [vmem:[#allocation2 + $0xb8] sm:$0xff]
        %v1579 = vld [vmem:[#allocation2 + $0xc0] sm:$0xff]
        %v1580 = vld [vmem:[#allocation2 + $0xc8] sm:$0xff]
        %v1581 = vld [vmem:[#allocation2 + $0xd0] sm:$0xff]
        %v1582 = vld [vmem:[#allocation2 + $0xd8] sm:$0xff]
        %v1583 = vld [vmem:[#allocation2 + $0xe0] sm:$0xff]
        %v1584 = vld [vmem:[#allocation2 + $0xe8] sm:$0xff]
        %v1585 = vld [vmem:[#allocation2 + $0xf0] sm:$0xff]
        %v1586 = vld [vmem:[#allocation2 + $0xf8] sm:$0xff]
        %v1587 = vld [vmem:[#allocation2 + $0x100] sm:$0xff]
        %v1588 = vld [vmem:[#allocation2 + $0x108] sm:$0xff]
        %v1589 = vld [vmem:[#allocation2 + $0x110] sm:$0xff]
        %v1590 = vld [vmem:[#allocation2 + $0x118] sm:$0xff]
        %v1591 = vld [vmem:[#allocation2 + $0x120] sm:$0xff]
        %v1592 = vld [vmem:[#allocation2 + $0x128] sm:$0xff]
        %v1593 = vld [vmem:[#allocation2 + $0x130] sm:$0xff]
        %v1594 = vld [vmem:[#allocation2 + $0x138] sm:$0xff]
        %v1595 = vld [vmem:[#allocation2 + $0x140] sm:$0xff]
        %v1596 = vld [vmem:[#allocation2 + $0x148] sm:$0xff]
        %v1597 = vld [vmem:[#allocation2 + $0x150] sm:$0xff]
        %v1598 = vld [vmem:[#allocation2 + $0x158] sm:$0xff]
        %v1599 = vld [vmem:[#allocation2 + $0x160] sm:$0xff]
        %v1600 = vld [vmem:[#allocation2 + $0x168] sm:$0xff]
        %v1601 = vld [vmem:[#allocation2 + $0x170] sm:$0xff]
        %v1602 = vld [vmem:[#allocation2 + $0x178] sm:$0xff]
        %v1603 = vld [vmem:[#allocation2 + $0x180] sm:$0xff]
        %v1604 = vld [vmem:[#allocation2 + $0x188] sm:$0xff]
        %v1605 = vld [vmem:[#allocation2 + $0x190] sm:$0xff]
        %v1606 = vld [vmem:[#allocation2 + $0x198] sm:$0xff]
        %v1607 = vld [vmem:[#allocation2 + $0x1a0] sm:$0xff]
        %v1608 = vld [vmem:[#allocation2 + $0x1a8] sm:$0xff]
        %v1609 = vld [vmem:[#allocation2 + $0x1b0] sm:$0xff]
        %v1610 = vld [vmem:[#allocation2 + $0x1b8] sm:$0xff]
        %v1611 = vld [vmem:[#allocation2 + $0x1c0] sm:$0xff]
        %v1612 = vld [vmem:[#allocation2 + $0x1c8] sm:$0xff]
        %v1613 = vld [vmem:[#allocation2 + $0x1d0] sm:$0xff]
        %v1614 = vld [vmem:[#allocation2 + $0x1d8] sm:$0xff]
        %v1615 = vld [vmem:[#allocation2 + $0x1e0] sm:$0xff]
        %v1616 = vld [vmem:[#allocation2 + $0x1e8] sm:$0xff]
        %v1617 = vld [vmem:[#allocation2 + $0x1f0] sm:$0xff]
        %v1618 = vld [vmem:[#allocation2 + $0x1f8] sm:$0xff]
        %1619 = vmatprep.subr.mxu0 %v1586
        %1620 = vmatpush1.msra.mxu0 %v1585
        %1621 = vmatprep.subr.mxu0 %v1584
        %1622 = vmatpush1.msra.mxu0 %v1583
        %1623 = vmatprep.subr.mxu0 %v1582
        %1624 = vmatpush1.msra.mxu0 %v1581
        %1625 = vmatprep.subr.mxu0 %v1580
        %1626 = vmatpush1.msra.mxu0 %v1579
        %1627 = vmatprep.subr.mxu0 %v1578
        %1628 = vmatpush1.msra.mxu0 %v1577
        %1629 = vmatprep.subr.mxu0 %v1576
        %1630 = vmatpush1.msra.mxu0 %v1575
        %1631 = vmatprep.subr.mxu0 %v1574
        %1632 = vmatpush1.msra.mxu0 %v1573
        %1633 = vmatprep.subr.mxu0 %v1572
        %1634 = vmatpush1.msra.mxu0 %v1571
        %1635 = vmatprep.subr.mxu0 %v1570
        %1636 = vmatpush1.msra.mxu0 %v1569
        %1637 = vmatprep.subr.mxu0 %v1568
        %1638 = vmatpush1.msra.mxu0 %v1567
        %1639 = vmatprep.subr.mxu0 %v1566
        %1640 = vmatpush1.msra.mxu0 %v1565
        %1641 = vmatprep.subr.mxu0 %v1564
        %1642 = vmatpush1.msra.mxu0 %v1563
        %1643 = vmatprep.subr.mxu0 %v1562
        %1644 = vmatpush1.msra.mxu0 %v1561
        %1645 = vmatprep.subr.mxu0 %v1560
        %1646 = vmatpush1.msra.mxu0 %v1559
        %1647 = vmatprep.subr.mxu0 %v1558
        %1648 = vmatpush1.msra.mxu0 %v1557
        %1649 = vmatprep.subr.mxu0 %v1556
        %1650 = vmatpush1.msra.mxu0 %v1555
        %1651 = vmatprep.subr.mxu0 %v1618
        %1652 = vmatpush2.msra.mxu0 %v1617
        %1653 = vmatprep.subr.mxu0 %v1616
        %1654 = vmatpush2.msra.mxu0 %v1615
        %1655 = vmatprep.subr.mxu0 %v1614
        %1656 = vmatpush2.msra.mxu0 %v1613
        %1657 = vmatprep.subr.mxu0 %v1612
        %1658 = vmatpush2.msra.mxu0 %v1611
        %1659 = vmatprep.subr.mxu0 %v1610
        %1660 = vmatpush2.msra.mxu0 %v1609
        %1661 = vmatprep.subr.mxu0 %v1608
        %1662 = vmatpush2.msra.mxu0 %v1607
        %1663 = vmatprep.subr.mxu0 %v1606
        %1664 = vmatpush2.msra.mxu0 %v1605
        %1665 = vmatprep.subr.mxu0 %v1604
        %1666 = vmatpush2.msra.mxu0 %v1603
        %1667 = vmatprep.subr.mxu0 %v1602
        %1668 = vmatpush2.msra.mxu0 %v1601
        %1669 = vmatprep.subr.mxu0 %v1600
        %1670 = vmatpush2.msra.mxu0 %v1599
        %1671 = vmatprep.subr.mxu0 %v1598
        %1672 = vmatpush2.msra.mxu0 %v1597
        %1673 = vmatprep.subr.mxu0 %v1596
        %1674 = vmatpush2.msra.mxu0 %v1595
        %1675 = vmatprep.subr.mxu0 %v1594
        %1676 = vmatpush2.msra.mxu0 %v1593
        %1677 = vmatprep.subr.mxu0 %v1592
        %1678 = vmatpush2.msra.mxu0 %v1591
        %1679 = vmatprep.subr.mxu0 %v1590
        %1680 = vmatpush2.msra.mxu0 %v1589
        %1681 = vmatprep.subr.mxu0 %v1588
        %1682 = vmatpush2.msra.mxu0 %v1587
        %1683 = vmatprep.mubr.f32.mxu0 %v1552
        %1684 = vmatmul.mubr.f32.gmra.mxu0 %v1551
        %v1685 = vpop.f32.mrf.mxu0
        %v1686 = vadd.f32 0.0, %v1685
        %v1687 = vpop.f32.mrf.mxu0
        %1688 = vmatprep.mubr.f32.mxu0 %v1554
        %1689 = vmatmul.mubr.f32.gmra.mxu0 %v1553
        %v1690 = vpop.f32.mrf.mxu0
        %v1691 = vpop.f32.mrf.mxu0
        %v1692 = vadd.f32 0.0, %v1691
        %1693 = vdwg.mxu0
        %v1695 = vrot.slane %v1686, 1
        %1696 = vrot.lane.b32.xlu0 %v1695, 112
        %v1697 = vpop.permute.xlu0 %1696
        %v1699 = vadd.f32 %v1686, %v1697
        %v1701 = vrot.slane %v1692, 1
        %1702 = vrot.lane.b32.xlu0 %v1701, 112
        %v1703 = vpop.permute.xlu0 %1702
        %v1705 = vadd.f32 %v1692, %v1703
        %v1707 = vrot.slane %v1699, 2
        %1708 = vrot.lane.b32.xlu0 %v1707, 96
        %v1709 = vpop.permute.xlu0 %1708
        %v1711 = vadd.f32 %v1699, %v1709
        %v1713 = vrot.slane %v1705, 2
        %1714 = vrot.lane.b32.xlu0 %v1713, 96
        %v1715 = vpop.permute.xlu0 %1714
        %v1717 = vadd.f32 %v1705, %v1715
        %v1719 = vrot.slane %v1711, 4
        %1720 = vrot.lane.b32.xlu0 %v1719, 64
        %v1721 = vpop.permute.xlu0 %1720
        %v1723 = vadd.f32 %v1711, %v1721
        %v1725 = vrot.slane %v1717, 4
        %1726 = vrot.lane.b32.xlu0 %v1725, 64
        %v1727 = vpop.permute.xlu0 %1726
        %v1729 = vadd.f32 %v1717, %v1727
        %v1730 = vadd.f32 %v1723, %v1729
        %v1731 = vld [vmem:[%s4] sm:$0x1]
        %v1732 = vadd.f32 %v1730, %v1731
        %vm1733 = vcmask 73728
        %1734 = vst.msk [vmem:[%s231] sm:$0x1] %vm1733, %v1732
        %s1735 = sand.u32 %s138, 1
        %s1736 = scalar_lea.sflag [#allocation4], %s1735
        %s1737 = sand.u32 %s138, 1
        %s1738 = scalar_lea.vmem [#allocation5], %s1737
        // Predicated region
        $region45: #{convnet2_forward.1} parent=39 // pred_check
          %p1739 = pneg %p148
        $region46: #{convnet2_forward.1} parent=39 // pred_check_branch
          %1741 = sbr.rel (%p1739) target = $region48
        $region47: #{convnet2_forward.1} parent=39 // pred_region
          %s1743 = ssub.s32 16, 16
          %1744 = vsyncadd %s1736, %s1743
          %s1745 = smul.addr %s20, 16
          %s1746 = scalar_lea.hbm %s5, %s1745
          %s1748 = sshll.u32 %s1738, 4
          %s1749 = int_to_ptr.vmem [resolvable:$true] %s1748
          %1751 = dma.vmem_to_hbm [thread:$0]  %s1749, 16, %s1746, %s1736
        $region48: #{convnet2_forward.1} parent=39 // pred_fallthru
          _
      $region40: #{convnet2_forward.1} parent=5 // pred_fallthru
        _
      %p1752 = scmp.le.s32.totalorder 2, %s15
      // Predicated region
      $region49: #{convnet2_forward.1} parent=5 // pred_check
        %p1753 = pneg %p1752
      $region50: #{convnet2_forward.1} parent=5 // pred_check_branch
        %1755 = sbr.rel (%p1753) target = $region52
      $region51: #{convnet2_forward.1} parent=5 // pred_region
        %s1756 = ssub.s32 %s15, 2
        // Predicated region
        $region53: #{convnet2_forward.1} parent=51 // pred_check
          %p1757 = pneg %p154
        $region54: #{convnet2_forward.1} parent=51 // pred_check_branch
          %1759 = sbr.rel (%p1757) target = $region56
        $region55: #{convnet2_forward.1} parent=51 // pred_region
          %s1760 = sand.u32 %s139, 1
          %s1761 = scalar_lea.sflag [#allocation4], %s1760
          %s1762 = sand.u32 %s139, 1
          %s1763 = scalar_lea.vmem [#allocation5], %s1762
          %1764 = dma.done %s1761, 16
        $region56: #{convnet2_forward.1} parent=51 // pred_fallthru
          _
      $region52: #{convnet2_forward.1} parent=5 // pred_fallthru
        _
    $region6: #{convnet2_forward.1} parent=1 // loop_footer
      %s19 = sadd.s32 1, %s15
    $region7: #{convnet2_forward.1} parent=1 // loop_footer_branch
      %14 = sbr.rel target = $region3
    $region8: #{convnet2_forward.1} parent=1 // loop_exit
      _
    %1765 = vsyncpa [#allocation3], 1
    %s1766 = scalar_lea.sflag [#allocation3], 1
    %1767 = vsyncpa %s1766, 1
    %1768 = vsyncpa [#allocation4], 1
    %s1769 = scalar_lea.sflag [#allocation4], 1
    %1770 = vsyncpa %s1769, 1

</llo_original>
